<compile_context>
chip_gen: v5e
topology: v5e:2x2
jax: 0.10.0
libtpu: 0.0.40
codegen_flags: <defaults>
</compile_context>

<pallas_src>
import jax
import jax.numpy as jnp
from jax.experimental import pallas as pl
from jax.experimental.pallas import tpu as pltpu


# ----------------------------------------------------------------------------------
# Pallas kernel: one grid step processes a block of TB tweets end to end.
# ----------------------------------------------------------------------------------
def can_kernel(
    embeds_ref,   # (L, TB, 128)   time-major tweet embeddings (lane-padded)
    image_ref,    # (TB, 49, 512)  image features
    w_ih_ref,     # (128, 512)     fused LSTM input weights  [i | f | g | o], 128 lanes/gate
    w_hh_ref,     # (128, 512)     fused LSTM hidden weights
    b_lstm_ref,   # (1, 512)       fused LSTM bias (b_ih + b_hh)
    w_img_ref,    # (512, 128)     imageConvertLayer weight (transposed, lane-padded)
    b_img_ref,    # (1, 128)       imageConvertLayer bias
    w_f_ref,      # (128, 2)       classifier W_f (transposed, row-padded)
    b_f_ref,      # (1, 2)         classifier bias
    out_ref,      # (TB, 2)        per-tweet logits for this block
):
    L, TB, G = embeds_ref.shape          # G = 128 (padded embedding / hidden width)
    P = image_ref.shape[1]               # 49 spatial positions

    # Hoisted weight/bias loads (outside the recurrence).
    w_hh = w_hh_ref[...]                 # (G, 4G)
    b = b_lstm_ref[...]                  # (1, 4G)

    # ---------------- LSTM: input projection hoisted off the serial chain ----------
    x_all = embeds_ref[...].reshape(L * TB, G)
    xw = jnp.dot(x_all, w_ih_ref[...], preferred_element_type=jnp.float32)
    xw = (xw + b).reshape(L, TB, 4 * G)  # bias folded once, broadcast hoisted

    h = jnp.zeros((TB, G), jnp.float32)
    c = jnp.zeros((TB, G), jnp.float32)
    hsum = jnp.zeros((TB, G), jnp.float32)   # v_T = sum_t h_t  (size-1 softmax == 1)

    # Static unroll (L is small and fixed) -> LLO can overlap EUP/MXU across steps.
    for t in range(L):
        pre = xw[t] + jnp.dot(h, w_hh, preferred_element_type=jnp.float32)  # (TB, 4G)
        i_g = jax.nn.sigmoid(pre[:, 0 * G:1 * G])
        f_g = jax.nn.sigmoid(pre[:, 1 * G:2 * G])
        g_g = jnp.tanh(pre[:, 2 * G:3 * G])
        o_g = jax.nn.sigmoid(pre[:, 3 * G:4 * G])
        c = f_g * c + i_g * g_g
        h = o_g * jnp.tanh(c)
        hsum = hsum + h

    # ---------------- image path: column sum folded through the linear -------------
    # v_I = sum_p (img_p @ W_img + b_img) = (sum_p img_p) @ W_img + P * b_img
    img_sum = jnp.sum(image_ref[...], axis=1)                       # (TB, 512)
    v_i = (jnp.dot(img_sum, w_img_ref[...], preferred_element_type=jnp.float32)
           + float(P) * b_img_ref[...])                             # (TB, 128)

    # ---------------- classifier (per-tweet logits; mean taken outside) ------------
    f = v_i + hsum                                                  # (TB, 128)
    out_ref[...] = (jnp.dot(f, w_f_ref[...], preferred_element_type=jnp.float32)
                    + b_f_ref[...])                                 # (TB, 2)


# ----------------------------------------------------------------------------------
# Wrapper: padding, weight packing glue, pallas_call, final masked mean.
# ----------------------------------------------------------------------------------
def can_forward(embeds, images, packed, *, block_tweets=8):
    """embeds: (N, L, 100) f32 ; images: (N, 49, 512) f32 ; returns (1, 2) f32."""
    N, L, E = embeds.shape
    P, S = images.shape[1], images.shape[2]
    EP = 128                                   # lane-padded width

    # TB: multiple of 8.  Double-buffered image blocks cost ~TB*200 KB, so cap
    # TB ~ 128 on v7x (64 MiB VMEM); ~256 is fine on v5e/v6e with the VMEM limit raised.
    TB = max(8, min(int(block_tweets), 128))
    TB = ((TB + 7) // 8) * 8
    n_blocks = -(-N // TB)
    N_pad = n_blocks * TB

    # Host-side padding + time-major transpose (plain XLA glue).
    embeds_p = jnp.zeros((N_pad, L, EP), jnp.float32).at[:N, :, :E].set(embeds)
    embeds_t = jnp.transpose(embeds_p, (1, 0, 2))                   # (L, N_pad, EP)
    images_p = jnp.zeros((N_pad, P, S), jnp.float32).at[:N].set(images)

    weights = [packed[k] for k in
               ("w_ih", "w_hh", "b_lstm", "w_img", "b_img", "w_f", "b_f")]

    def full_spec(shape):
        zeros = (0,) * len(shape)
        return pl.BlockSpec(shape, lambda t: zeros)

    per_tweet = pl.pallas_call(
        can_kernel,
        out_shape=jax.ShapeDtypeStruct((N_pad, 2), jnp.float32),
        grid_spec=pltpu.PrefetchScalarGridSpec(
            num_scalar_prefetch=0,
            grid=(n_blocks,),
            in_specs=[
                pl.BlockSpec((L, TB, EP), lambda t: (0, t, 0)),     # tweet block (time-major)
                pl.BlockSpec((TB, P, S), lambda t: (t, 0, 0)),      # image block
            ] + [full_spec(w.shape) for w in weights],
            out_specs=pl.BlockSpec((TB, 2), lambda t: (t, 0)),
        ),
        compiler_params=pltpu.CompilerParams(
            dimension_semantics=("parallel",)),                     # blocks are independent
    )(embeds_t, images_p, *weights)

    # Mask the zero-padded tweets, then mean (matches result /= len(data)).
    return jnp.mean(per_tweet[:N], axis=0, keepdims=True)


# ----------------------------------------------------------------------------------
# Parameter construction (natural PyTorch-like shapes) + host-side packing.
# ----------------------------------------------------------------------------------
def init_params(key, vocab_size, E):
    keys = jax.random.split(key, 8)

    def w(k, shape, scale=0.1):
        return (scale * jax.random.normal(k, shape)).astype(jnp.float32)

    emb_table = w(keys[0], (vocab_size + 2, E))
    emb_table = emb_table.at[vocab_size + 1].set(0.0)   # padding_idx row = 0

    # NOTE: W_VT/W_VI/W_PI/W_V_I/W_T/W_PT are intentionally not created: the model's
    # softmax over a size-1 dim makes both attention weights identically 1.0, so those
    # parameters provably never affect the output.
    params = dict(
        w_ih=w(keys[1], (4, E, E)),        # LSTM W_ih (gate order i,f,g,o; transposed)
        w_hh=w(keys[2], (4, E, E)),        # LSTM W_hh
        b_lstm=w(keys[3], (4, E)),         # b_ih + b_hh
        w_img=w(keys[4], (512, E)),        # imageConvertLayer (transposed)
        b_img=w(keys[5], (E,)),
        w_f=w(keys[6], (E, 2)),            # classifier W_f (transposed)
        b_f=w(keys[7], (2,)),
    )
    return emb_table, params


def pack_params(params, ep=128):
    """Pad to 128 lanes and fuse the 4 LSTM gates into single (128, 512) matrices."""
    E = params["w_ih"].shape[1]
    G = ep
    w_ih_cat = jnp.zeros((G, 4 * G), jnp.float32)
    w_hh_cat = jnp.zeros((G, 4 * G), jnp.float32)
    b_cat = jnp.zeros((1, 4 * G), jnp.float32)
    for k in range(4):                                     # gate order i, f, g, o
        w_ih_cat = w_ih_cat.at[:E, k * G:k * G + E].set(params["w_ih"][k])
        w_hh_cat = w_hh_cat.at[:E, k * G:k * G + E].set(params["w_hh"][k])
        b_cat = b_cat.at[0, k * G:k * G + E].set(params["b_lstm"][k])
    w_img_p = jnp.zeros((512, G), jnp.float32).at[:, :E].set(params["w_img"])
    b_img_p = jnp.zeros((1, G), jnp.float32).at[0, :E].set(params["b_img"])
    w_f_p = jnp.zeros((G, 2), jnp.float32).at[:E].set(params["w_f"])
    b_f_p = params["b_f"].reshape(1, 2).astype(jnp.float32)
    return dict(w_ih=w_ih_cat, w_hh=w_hh_cat, b_lstm=b_cat,
                w_img=w_img_p, b_img=b_img_p, w_f=w_f_p, b_f=b_f_p)


# ----------------------------------------------------------------------------------
# Pure-JAX reference of the original forward (for correctness checking).
# ----------------------------------------------------------------------------------
def can_reference(embeds, images, params):
    E = embeds.shape[-1]
    w_ih, w_hh, b_lstm = params["w_ih"], params["w_hh"], params["b_lstm"]

    def lstm_tweet(x):                       # x: (L, E)
        def step(carry, xt):
            h, c = carry
            g = [xt @ w_ih[k] + h @ w_hh[k] + b_lstm[k] for k in range(4)]
            i = jax.nn.sigmoid(g[0]); f = jax.nn.sigmoid(g[1])
            gg = jnp.tanh(g[2]);      o = jax.nn.sigmoid(g[3])
            c = f * c + i * gg
            h = o * jnp.tanh(c)
            return (h, c), h
        zeros = jnp.zeros((E,), jnp.float32)
        _, hs = jax.lax.scan(step, (zeros, zeros), x)
        return hs                            # (L, E)

    VT = jax.vmap(lstm_tweet)(embeds)                                   # (N, L, E)
    v_T = VT.sum(axis=1)                                                # (N, E)
    VI = jnp.einsum("nps,se->npe", images, params["w_img"]) + params["b_img"]
    v_I = VI.sum(axis=1)                                                # (N, E)
    p = (v_I + v_T) @ params["w_f"] + params["b_f"]                     # (N, 2)
    return p.mean(axis=0, keepdims=True)


if __name__ == "__main__":
    key = jax.random.PRNGKey(0)
    vocab_size = 50
    E = 100          # embedding/hidden size (model is hard-wired to 100)
    L = 8            # fix_length
    N_TWEETS = 5     # tweets for this user

    k_emb, k_ids, k_img = jax.random.split(key, 3)
    emb_table, params = init_params(k_emb, vocab_size, E)
    packed = pack_params(params)

    # TODO(synk): word2id is a host-side Python str->int dict; token ids are generated
    # directly here and the embedding gather is plain-JAX glue outside the kernel.
    ids = jax.random.randint(k_ids, (N_TWEETS, L), 0, vocab_size + 2)
    embeds = jnp.take(emb_table, ids, axis=0)                           # (N, L, 100)
    images = 0.1 * jax.random.normal(k_img, (N_TWEETS, 49, 512),
                                     dtype=jnp.float32)                 # (N, 49, 512)

    out = can_forward(embeds, images, packed)
    out = jax.block_until_ready(out)
    assert out.shape == (1, 2) and out.dtype == jnp.float32

    ref = jax.block_until_ready(can_reference(embeds, images, params))
    assert jnp.allclose(out, ref, rtol=1e-4, atol=1e-4)

    print("KERNEL_OK")
</pallas_src>

<mosaic_0001>
module attributes {stable_mosaic.version = 11 : i64} {
  func.func @can_kernel(%arg0: i32, %arg1: memref<8x8x128xf32, #tpu.memory_space<vmem>>, %arg2: memref<8x49x512xf32, #tpu.memory_space<vmem>>, %arg3: memref<128x512xf32, #tpu.memory_space<vmem>>, %arg4: memref<128x512xf32, #tpu.memory_space<vmem>>, %arg5: memref<1x512xf32, #tpu.memory_space<vmem>>, %arg6: memref<512x128xf32, #tpu.memory_space<vmem>>, %arg7: memref<1x128xf32, #tpu.memory_space<vmem>>, %arg8: memref<128x2xf32, #tpu.memory_space<vmem>>, %arg9: memref<1x2xf32, #tpu.memory_space<vmem>>, %arg10: memref<8x2xf32, #tpu.memory_space<vmem>>) attributes {dimension_semantics = [#tpu.dimension_semantics<parallel>], iteration_bounds = array<i64: 1>, scalar_prefetch = 0 : i64, scratch_operands = 0 : i64, tpu.core_type = #tpu.core_type<tc>, window_params = [{transform_indices = @transform_0, window_bounds = array<i64: 8, 8, 128>}, {transform_indices = @transform_1, window_bounds = array<i64: 8, 49, 512>}, {pipeline_mode = #tpu.pipeline_mode<synchronous>, transform_indices = @transform_2, window_bounds = array<i64: 128, 512>}, {pipeline_mode = #tpu.pipeline_mode<synchronous>, transform_indices = @transform_3, window_bounds = array<i64: 128, 512>}, {pipeline_mode = #tpu.pipeline_mode<synchronous>, transform_indices = @transform_4, window_bounds = array<i64: 1, 512>}, {pipeline_mode = #tpu.pipeline_mode<synchronous>, transform_indices = @transform_5, window_bounds = array<i64: 512, 128>}, {pipeline_mode = #tpu.pipeline_mode<synchronous>, transform_indices = @transform_6, window_bounds = array<i64: 1, 128>}, {pipeline_mode = #tpu.pipeline_mode<synchronous>, transform_indices = @transform_7, window_bounds = array<i64: 128, 2>}, {pipeline_mode = #tpu.pipeline_mode<synchronous>, transform_indices = @transform_8, window_bounds = array<i64: 1, 2>}, {transform_indices = @transform_9, window_bounds = array<i64: 8, 2>}]} {
    %c0 = arith.constant 0 : index
    %c0_0 = arith.constant 0 : index
    %0 = vector.load %arg4[%c0, %c0_0] : memref<128x512xf32, #tpu.memory_space<vmem>>, vector<128x512xf32>
    %c0_1 = arith.constant 0 : index
    %c0_2 = arith.constant 0 : index
    %1 = vector.load %arg5[%c0_1, %c0_2] : memref<1x512xf32, #tpu.memory_space<vmem>>, vector<1x512xf32>
    %c0_3 = arith.constant 0 : index
    %c0_4 = arith.constant 0 : index
    %c0_5 = arith.constant 0 : index
    %2 = vector.load %arg1[%c0_3, %c0_4, %c0_5] : memref<8x8x128xf32, #tpu.memory_space<vmem>>, vector<8x8x128xf32>
    %3 = vector.shape_cast %2 : vector<8x8x128xf32> to vector<64x128xf32>
    %c0_6 = arith.constant 0 : index
    %c0_7 = arith.constant 0 : index
    %4 = vector.load %arg3[%c0_6, %c0_7] : memref<128x512xf32, #tpu.memory_space<vmem>>, vector<128x512xf32>
    %cst = arith.constant dense<0.000000e+00> : vector<64x512xf32>
    %5 = tpu.matmul %3, %4, %cst {dimension_numbers = #tpu.dot_dimension_numbers<[1], [0], [0], [1], [0, 0, 1, 1], [], []>} : vector<64x128xf32>, vector<128x512xf32>, vector<64x512xf32> -> vector<64x512xf32>
    %6 = vector.broadcast %1 : vector<1x512xf32> to vector<64x512xf32>
    %7 = arith.addf %5, %6 : vector<64x512xf32>
    %8 = vector.shape_cast %7 : vector<64x512xf32> to vector<8x8x512xf32>
    %cst_8 = arith.constant 0.000000e+00 : f32
    %9 = vector.broadcast %cst_8 : f32 to vector<8x128xf32>
    %cst_9 = arith.constant 0.000000e+00 : f32
    %10 = vector.broadcast %cst_9 : f32 to vector<8x128xf32>
    %cst_10 = arith.constant 0.000000e+00 : f32
    %11 = vector.broadcast %cst_10 : f32 to vector<8x128xf32>
    %12 = vector.extract_strided_slice %8 {offsets = [0, 0, 0], sizes = [1, 8, 512], strides = [1, 1, 1]} : vector<8x8x512xf32> to vector<1x8x512xf32>
    %13 = vector.shape_cast %12 : vector<1x8x512xf32> to vector<8x512xf32>
    %cst_11 = arith.constant dense<0.000000e+00> : vector<8x512xf32>
    %14 = tpu.matmul %9, %0, %cst_11 {dimension_numbers = #tpu.dot_dimension_numbers<[1], [0], [0], [1], [0, 0, 1, 1], [], []>} : vector<8x128xf32>, vector<128x512xf32>, vector<8x512xf32> -> vector<8x512xf32>
    %15 = arith.addf %13, %14 : vector<8x512xf32>
    %16 = vector.extract_strided_slice %15 {offsets = [0, 0], sizes = [8, 128], strides = [1, 1]} : vector<8x512xf32> to vector<8x128xf32>
    %17 = arith.negf %16 : vector<8x128xf32>
    %18 = math.exp %17 : vector<8x128xf32>
    %cst_12 = arith.constant 1.000000e+00 : f32
    %19 = vector.broadcast %cst_12 : f32 to vector<8x128xf32>
    %20 = arith.addf %19, %18 : vector<8x128xf32>
    %21 = arith.divf %19, %20 : vector<8x128xf32>
    %22 = vector.extract_strided_slice %15 {offsets = [0, 128], sizes = [8, 128], strides = [1, 1]} : vector<8x512xf32> to vector<8x128xf32>
    %23 = arith.negf %22 : vector<8x128xf32>
    %24 = math.exp %23 : vector<8x128xf32>
    %cst_13 = arith.constant 1.000000e+00 : f32
    %25 = vector.broadcast %cst_13 : f32 to vector<8x128xf32>
    %26 = arith.addf %25, %24 : vector<8x128xf32>
    %27 = arith.divf %25, %26 : vector<8x128xf32>
    %28 = vector.extract_strided_slice %15 {offsets = [0, 256], sizes = [8, 128], strides = [1, 1]} : vector<8x512xf32> to vector<8x128xf32>
    %29 = math.tanh %28 : vector<8x128xf32>
    %30 = vector.extract_strided_slice %15 {offsets = [0, 384], sizes = [8, 128], strides = [1, 1]} : vector<8x512xf32> to vector<8x128xf32>
    %31 = arith.negf %30 : vector<8x128xf32>
    %32 = math.exp %31 : vector<8x128xf32>
    %cst_14 = arith.constant 1.000000e+00 : f32
    %33 = vector.broadcast %cst_14 : f32 to vector<8x128xf32>
    %34 = arith.addf %33, %32 : vector<8x128xf32>
    %35 = arith.divf %33, %34 : vector<8x128xf32>
    %36 = arith.mulf %27, %10 : vector<8x128xf32>
    %37 = arith.mulf %21, %29 : vector<8x128xf32>
    %38 = arith.addf %36, %37 : vector<8x128xf32>
    %39 = math.tanh %38 : vector<8x128xf32>
    %40 = arith.mulf %35, %39 : vector<8x128xf32>
    %41 = arith.addf %11, %40 : vector<8x128xf32>
    %42 = vector.extract_strided_slice %8 {offsets = [1, 0, 0], sizes = [1, 8, 512], strides = [1, 1, 1]} : vector<8x8x512xf32> to vector<1x8x512xf32>
    %43 = vector.shape_cast %42 : vector<1x8x512xf32> to vector<8x512xf32>
    %cst_15 = arith.constant dense<0.000000e+00> : vector<8x512xf32>
    %44 = tpu.matmul %40, %0, %cst_15 {dimension_numbers = #tpu.dot_dimension_numbers<[1], [0], [0], [1], [0, 0, 1, 1], [], []>} : vector<8x128xf32>, vector<128x512xf32>, vector<8x512xf32> -> vector<8x512xf32>
    %45 = arith.addf %43, %44 : vector<8x512xf32>
    %46 = vector.extract_strided_slice %45 {offsets = [0, 0], sizes = [8, 128], strides = [1, 1]} : vector<8x512xf32> to vector<8x128xf32>
    %47 = arith.negf %46 : vector<8x128xf32>
    %48 = math.exp %47 : vector<8x128xf32>
    %cst_16 = arith.constant 1.000000e+00 : f32
    %49 = vector.broadcast %cst_16 : f32 to vector<8x128xf32>
    %50 = arith.addf %49, %48 : vector<8x128xf32>
    %51 = arith.divf %49, %50 : vector<8x128xf32>
    %52 = vector.extract_strided_slice %45 {offsets = [0, 128], sizes = [8, 128], strides = [1, 1]} : vector<8x512xf32> to vector<8x128xf32>
    %53 = arith.negf %52 : vector<8x128xf32>
    %54 = math.exp %53 : vector<8x128xf32>
    %cst_17 = arith.constant 1.000000e+00 : f32
    %55 = vector.broadcast %cst_17 : f32 to vector<8x128xf32>
    %56 = arith.addf %55, %54 : vector<8x128xf32>
    %57 = arith.divf %55, %56 : vector<8x128xf32>
    %58 = vector.extract_strided_slice %45 {offsets = [0, 256], sizes = [8, 128], strides = [1, 1]} : vector<8x512xf32> to vector<8x128xf32>
    %59 = math.tanh %58 : vector<8x128xf32>
    %60 = vector.extract_strided_slice %45 {offsets = [0, 384], sizes = [8, 128], strides = [1, 1]} : vector<8x512xf32> to vector<8x128xf32>
    %61 = arith.negf %60 : vector<8x128xf32>
    %62 = math.exp %61 : vector<8x128xf32>
    %cst_18 = arith.constant 1.000000e+00 : f32
    %63 = vector.broadcast %cst_18 : f32 to vector<8x128xf32>
    %64 = arith.addf %63, %62 : vector<8x128xf32>
    %65 = arith.divf %63, %64 : vector<8x128xf32>
    %66 = arith.mulf %57, %38 : vector<8x128xf32>
    %67 = arith.mulf %51, %59 : vector<8x128xf32>
    %68 = arith.addf %66, %67 : vector<8x128xf32>
    %69 = math.tanh %68 : vector<8x128xf32>
    %70 = arith.mulf %65, %69 : vector<8x128xf32>
    %71 = arith.addf %41, %70 : vector<8x128xf32>
    %72 = vector.extract_strided_slice %8 {offsets = [2, 0, 0], sizes = [1, 8, 512], strides = [1, 1, 1]} : vector<8x8x512xf32> to vector<1x8x512xf32>
    %73 = vector.shape_cast %72 : vector<1x8x512xf32> to vector<8x512xf32>
    %cst_19 = arith.constant dense<0.000000e+00> : vector<8x512xf32>
    %74 = tpu.matmul %70, %0, %cst_19 {dimension_numbers = #tpu.dot_dimension_numbers<[1], [0], [0], [1], [0, 0, 1, 1], [], []>} : vector<8x128xf32>, vector<128x512xf32>, vector<8x512xf32> -> vector<8x512xf32>
    %75 = arith.addf %73, %74 : vector<8x512xf32>
    %76 = vector.extract_strided_slice %75 {offsets = [0, 0], sizes = [8, 128], strides = [1, 1]} : vector<8x512xf32> to vector<8x128xf32>
    %77 = arith.negf %76 : vector<8x128xf32>
    %78 = math.exp %77 : vector<8x128xf32>
    %cst_20 = arith.constant 1.000000e+00 : f32
    %79 = vector.broadcast %cst_20 : f32 to vector<8x128xf32>
    %80 = arith.addf %79, %78 : vector<8x128xf32>
    %81 = arith.divf %79, %80 : vector<8x128xf32>
    %82 = vector.extract_strided_slice %75 {offsets = [0, 128], sizes = [8, 128], strides = [1, 1]} : vector<8x512xf32> to vector<8x128xf32>
    %83 = arith.negf %82 : vector<8x128xf32>
    %84 = math.exp %83 : vector<8x128xf32>
    %cst_21 = arith.constant 1.000000e+00 : f32
    %85 = vector.broadcast %cst_21 : f32 to vector<8x128xf32>
    %86 = arith.addf %85, %84 : vector<8x128xf32>
    %87 = arith.divf %85, %86 : vector<8x128xf32>
    %88 = vector.extract_strided_slice %75 {offsets = [0, 256], sizes = [8, 128], strides = [1, 1]} : vector<8x512xf32> to vector<8x128xf32>
    %89 = math.tanh %88 : vector<8x128xf32>
    %90 = vector.extract_strided_slice %75 {offsets = [0, 384], sizes = [8, 128], strides = [1, 1]} : vector<8x512xf32> to vector<8x128xf32>
    %91 = arith.negf %90 : vector<8x128xf32>
    %92 = math.exp %91 : vector<8x128xf32>
    %cst_22 = arith.constant 1.000000e+00 : f32
    %93 = vector.broadcast %cst_22 : f32 to vector<8x128xf32>
    %94 = arith.addf %93, %92 : vector<8x128xf32>
    %95 = arith.divf %93, %94 : vector<8x128xf32>
    %96 = arith.mulf %87, %68 : vector<8x128xf32>
    %97 = arith.mulf %81, %89 : vector<8x128xf32>
    %98 = arith.addf %96, %97 : vector<8x128xf32>
    %99 = math.tanh %98 : vector<8x128xf32>
    %100 = arith.mulf %95, %99 : vector<8x128xf32>
    %101 = arith.addf %71, %100 : vector<8x128xf32>
    %102 = vector.extract_strided_slice %8 {offsets = [3, 0, 0], sizes = [1, 8, 512], strides = [1, 1, 1]} : vector<8x8x512xf32> to vector<1x8x512xf32>
    %103 = vector.shape_cast %102 : vector<1x8x512xf32> to vector<8x512xf32>
    %cst_23 = arith.constant dense<0.000000e+00> : vector<8x512xf32>
    %104 = tpu.matmul %100, %0, %cst_23 {dimension_numbers = #tpu.dot_dimension_numbers<[1], [0], [0], [1], [0, 0, 1, 1], [], []>} : vector<8x128xf32>, vector<128x512xf32>, vector<8x512xf32> -> vector<8x512xf32>
    %105 = arith.addf %103, %104 : vector<8x512xf32>
    %106 = vector.extract_strided_slice %105 {offsets = [0, 0], sizes = [8, 128], strides = [1, 1]} : vector<8x512xf32> to vector<8x128xf32>
    %107 = arith.negf %106 : vector<8x128xf32>
    %108 = math.exp %107 : vector<8x128xf32>
    %cst_24 = arith.constant 1.000000e+00 : f32
    %109 = vector.broadcast %cst_24 : f32 to vector<8x128xf32>
    %110 = arith.addf %109, %108 : vector<8x128xf32>
    %111 = arith.divf %109, %110 : vector<8x128xf32>
    %112 = vector.extract_strided_slice %105 {offsets = [0, 128], sizes = [8, 128], strides = [1, 1]} : vector<8x512xf32> to vector<8x128xf32>
    %113 = arith.negf %112 : vector<8x128xf32>
    %114 = math.exp %113 : vector<8x128xf32>
    %cst_25 = arith.constant 1.000000e+00 : f32
    %115 = vector.broadcast %cst_25 : f32 to vector<8x128xf32>
    %116 = arith.addf %115, %114 : vector<8x128xf32>
    %117 = arith.divf %115, %116 : vector<8x128xf32>
    %118 = vector.extract_strided_slice %105 {offsets = [0, 256], sizes = [8, 128], strides = [1, 1]} : vector<8x512xf32> to vector<8x128xf32>
    %119 = math.tanh %118 : vector<8x128xf32>
    %120 = vector.extract_strided_slice %105 {offsets = [0, 384], sizes = [8, 128], strides = [1, 1]} : vector<8x512xf32> to vector<8x128xf32>
    %121 = arith.negf %120 : vector<8x128xf32>
    %122 = math.exp %121 : vector<8x128xf32>
    %cst_26 = arith.constant 1.000000e+00 : f32
    %123 = vector.broadcast %cst_26 : f32 to vector<8x128xf32>
    %124 = arith.addf %123, %122 : vector<8x128xf32>
    %125 = arith.divf %123, %124 : vector<8x128xf32>
    %126 = arith.mulf %117, %98 : vector<8x128xf32>
    %127 = arith.mulf %111, %119 : vector<8x128xf32>
    %128 = arith.addf %126, %127 : vector<8x128xf32>
    %129 = math.tanh %128 : vector<8x128xf32>
    %130 = arith.mulf %125, %129 : vector<8x128xf32>
    %131 = arith.addf %101, %130 : vector<8x128xf32>
    %132 = vector.extract_strided_slice %8 {offsets = [4, 0, 0], sizes = [1, 8, 512], strides = [1, 1, 1]} : vector<8x8x512xf32> to vector<1x8x512xf32>
    %133 = vector.shape_cast %132 : vector<1x8x512xf32> to vector<8x512xf32>
    %cst_27 = arith.constant dense<0.000000e+00> : vector<8x512xf32>
    %134 = tpu.matmul %130, %0, %cst_27 {dimension_numbers = #tpu.dot_dimension_numbers<[1], [0], [0], [1], [0, 0, 1, 1], [], []>} : vector<8x128xf32>, vector<128x512xf32>, vector<8x512xf32> -> vector<8x512xf32>
    %135 = arith.addf %133, %134 : vector<8x512xf32>
    %136 = vector.extract_strided_slice %135 {offsets = [0, 0], sizes = [8, 128], strides = [1, 1]} : vector<8x512xf32> to vector<8x128xf32>
    %137 = arith.negf %136 : vector<8x128xf32>
    %138 = math.exp %137 : vector<8x128xf32>
    %cst_28 = arith.constant 1.000000e+00 : f32
    %139 = vector.broadcast %cst_28 : f32 to vector<8x128xf32>
    %140 = arith.addf %139, %138 : vector<8x128xf32>
    %141 = arith.divf %139, %140 : vector<8x128xf32>
    %142 = vector.extract_strided_slice %135 {offsets = [0, 128], sizes = [8, 128], strides = [1, 1]} : vector<8x512xf32> to vector<8x128xf32>
    %143 = arith.negf %142 : vector<8x128xf32>
    %144 = math.exp %143 : vector<8x128xf32>
    %cst_29 = arith.constant 1.000000e+00 : f32
    %145 = vector.broadcast %cst_29 : f32 to vector<8x128xf32>
    %146 = arith.addf %145, %144 : vector<8x128xf32>
    %147 = arith.divf %145, %146 : vector<8x128xf32>
    %148 = vector.extract_strided_slice %135 {offsets = [0, 256], sizes = [8, 128], strides = [1, 1]} : vector<8x512xf32> to vector<8x128xf32>
    %149 = math.tanh %148 : vector<8x128xf32>
    %150 = vector.extract_strided_slice %135 {offsets = [0, 384], sizes = [8, 128], strides = [1, 1]} : vector<8x512xf32> to vector<8x128xf32>
    %151 = arith.negf %150 : vector<8x128xf32>
    %152 = math.exp %151 : vector<8x128xf32>
    %cst_30 = arith.constant 1.000000e+00 : f32
    %153 = vector.broadcast %cst_30 : f32 to vector<8x128xf32>
    %154 = arith.addf %153, %152 : vector<8x128xf32>
    %155 = arith.divf %153, %154 : vector<8x128xf32>
    %156 = arith.mulf %147, %128 : vector<8x128xf32>
    %157 = arith.mulf %141, %149 : vector<8x128xf32>
    %158 = arith.addf %156, %157 : vector<8x128xf32>
    %159 = math.tanh %158 : vector<8x128xf32>
    %160 = arith.mulf %155, %159 : vector<8x128xf32>
    %161 = arith.addf %131, %160 : vector<8x128xf32>
    %162 = vector.extract_strided_slice %8 {offsets = [5, 0, 0], sizes = [1, 8, 512], strides = [1, 1, 1]} : vector<8x8x512xf32> to vector<1x8x512xf32>
    %163 = vector.shape_cast %162 : vector<1x8x512xf32> to vector<8x512xf32>
    %cst_31 = arith.constant dense<0.000000e+00> : vector<8x512xf32>
    %164 = tpu.matmul %160, %0, %cst_31 {dimension_numbers = #tpu.dot_dimension_numbers<[1], [0], [0], [1], [0, 0, 1, 1], [], []>} : vector<8x128xf32>, vector<128x512xf32>, vector<8x512xf32> -> vector<8x512xf32>
    %165 = arith.addf %163, %164 : vector<8x512xf32>
    %166 = vector.extract_strided_slice %165 {offsets = [0, 0], sizes = [8, 128], strides = [1, 1]} : vector<8x512xf32> to vector<8x128xf32>
    %167 = arith.negf %166 : vector<8x128xf32>
    %168 = math.exp %167 : vector<8x128xf32>
    %cst_32 = arith.constant 1.000000e+00 : f32
    %169 = vector.broadcast %cst_32 : f32 to vector<8x128xf32>
    %170 = arith.addf %169, %168 : vector<8x128xf32>
    %171 = arith.divf %169, %170 : vector<8x128xf32>
    %172 = vector.extract_strided_slice %165 {offsets = [0, 128], sizes = [8, 128], strides = [1, 1]} : vector<8x512xf32> to vector<8x128xf32>
    %173 = arith.negf %172 : vector<8x128xf32>
    %174 = math.exp %173 : vector<8x128xf32>
    %cst_33 = arith.constant 1.000000e+00 : f32
    %175 = vector.broadcast %cst_33 : f32 to vector<8x128xf32>
    %176 = arith.addf %175, %174 : vector<8x128xf32>
    %177 = arith.divf %175, %176 : vector<8x128xf32>
    %178 = vector.extract_strided_slice %165 {offsets = [0, 256], sizes = [8, 128], strides = [1, 1]} : vector<8x512xf32> to vector<8x128xf32>
    %179 = math.tanh %178 : vector<8x128xf32>
    %180 = vector.extract_strided_slice %165 {offsets = [0, 384], sizes = [8, 128], strides = [1, 1]} : vector<8x512xf32> to vector<8x128xf32>
    %181 = arith.negf %180 : vector<8x128xf32>
    %182 = math.exp %181 : vector<8x128xf32>
    %cst_34 = arith.constant 1.000000e+00 : f32
    %183 = vector.broadcast %cst_34 : f32 to vector<8x128xf32>
    %184 = arith.addf %183, %182 : vector<8x128xf32>
    %185 = arith.divf %183, %184 : vector<8x128xf32>
    %186 = arith.mulf %177, %158 : vector<8x128xf32>
    %187 = arith.mulf %171, %179 : vector<8x128xf32>
    %188 = arith.addf %186, %187 : vector<8x128xf32>
    %189 = math.tanh %188 : vector<8x128xf32>
    %190 = arith.mulf %185, %189 : vector<8x128xf32>
    %191 = arith.addf %161, %190 : vector<8x128xf32>
    %192 = vector.extract_strided_slice %8 {offsets = [6, 0, 0], sizes = [1, 8, 512], strides = [1, 1, 1]} : vector<8x8x512xf32> to vector<1x8x512xf32>
    %193 = vector.shape_cast %192 : vector<1x8x512xf32> to vector<8x512xf32>
    %cst_35 = arith.constant dense<0.000000e+00> : vector<8x512xf32>
    %194 = tpu.matmul %190, %0, %cst_35 {dimension_numbers = #tpu.dot_dimension_numbers<[1], [0], [0], [1], [0, 0, 1, 1], [], []>} : vector<8x128xf32>, vector<128x512xf32>, vector<8x512xf32> -> vector<8x512xf32>
    %195 = arith.addf %193, %194 : vector<8x512xf32>
    %196 = vector.extract_strided_slice %195 {offsets = [0, 0], sizes = [8, 128], strides = [1, 1]} : vector<8x512xf32> to vector<8x128xf32>
    %197 = arith.negf %196 : vector<8x128xf32>
    %198 = math.exp %197 : vector<8x128xf32>
    %cst_36 = arith.constant 1.000000e+00 : f32
    %199 = vector.broadcast %cst_36 : f32 to vector<8x128xf32>
    %200 = arith.addf %199, %198 : vector<8x128xf32>
    %201 = arith.divf %199, %200 : vector<8x128xf32>
    %202 = vector.extract_strided_slice %195 {offsets = [0, 128], sizes = [8, 128], strides = [1, 1]} : vector<8x512xf32> to vector<8x128xf32>
    %203 = arith.negf %202 : vector<8x128xf32>
    %204 = math.exp %203 : vector<8x128xf32>
    %cst_37 = arith.constant 1.000000e+00 : f32
    %205 = vector.broadcast %cst_37 : f32 to vector<8x128xf32>
    %206 = arith.addf %205, %204 : vector<8x128xf32>
    %207 = arith.divf %205, %206 : vector<8x128xf32>
    %208 = vector.extract_strided_slice %195 {offsets = [0, 256], sizes = [8, 128], strides = [1, 1]} : vector<8x512xf32> to vector<8x128xf32>
    %209 = math.tanh %208 : vector<8x128xf32>
    %210 = vector.extract_strided_slice %195 {offsets = [0, 384], sizes = [8, 128], strides = [1, 1]} : vector<8x512xf32> to vector<8x128xf32>
    %211 = arith.negf %210 : vector<8x128xf32>
    %212 = math.exp %211 : vector<8x128xf32>
    %cst_38 = arith.constant 1.000000e+00 : f32
    %213 = vector.broadcast %cst_38 : f32 to vector<8x128xf32>
    %214 = arith.addf %213, %212 : vector<8x128xf32>
    %215 = arith.divf %213, %214 : vector<8x128xf32>
    %216 = arith.mulf %207, %188 : vector<8x128xf32>
    %217 = arith.mulf %201, %209 : vector<8x128xf32>
    %218 = arith.addf %216, %217 : vector<8x128xf32>
    %219 = math.tanh %218 : vector<8x128xf32>
    %220 = arith.mulf %215, %219 : vector<8x128xf32>
    %221 = arith.addf %191, %220 : vector<8x128xf32>
    %222 = vector.extract_strided_slice %8 {offsets = [7, 0, 0], sizes = [1, 8, 512], strides = [1, 1, 1]} : vector<8x8x512xf32> to vector<1x8x512xf32>
    %223 = vector.shape_cast %222 : vector<1x8x512xf32> to vector<8x512xf32>
    %cst_39 = arith.constant dense<0.000000e+00> : vector<8x512xf32>
    %224 = tpu.matmul %220, %0, %cst_39 {dimension_numbers = #tpu.dot_dimension_numbers<[1], [0], [0], [1], [0, 0, 1, 1], [], []>} : vector<8x128xf32>, vector<128x512xf32>, vector<8x512xf32> -> vector<8x512xf32>
    %225 = arith.addf %223, %224 : vector<8x512xf32>
    %226 = vector.extract_strided_slice %225 {offsets = [0, 0], sizes = [8, 128], strides = [1, 1]} : vector<8x512xf32> to vector<8x128xf32>
    %227 = arith.negf %226 : vector<8x128xf32>
    %228 = math.exp %227 : vector<8x128xf32>
    %cst_40 = arith.constant 1.000000e+00 : f32
    %229 = vector.broadcast %cst_40 : f32 to vector<8x128xf32>
    %230 = arith.addf %229, %228 : vector<8x128xf32>
    %231 = arith.divf %229, %230 : vector<8x128xf32>
    %232 = vector.extract_strided_slice %225 {offsets = [0, 128], sizes = [8, 128], strides = [1, 1]} : vector<8x512xf32> to vector<8x128xf32>
    %233 = arith.negf %232 : vector<8x128xf32>
    %234 = math.exp %233 : vector<8x128xf32>
    %cst_41 = arith.constant 1.000000e+00 : f32
    %235 = vector.broadcast %cst_41 : f32 to vector<8x128xf32>
    %236 = arith.addf %235, %234 : vector<8x128xf32>
    %237 = arith.divf %235, %236 : vector<8x128xf32>
    %238 = vector.extract_strided_slice %225 {offsets = [0, 256], sizes = [8, 128], strides = [1, 1]} : vector<8x512xf32> to vector<8x128xf32>
    %239 = math.tanh %238 : vector<8x128xf32>
    %240 = vector.extract_strided_slice %225 {offsets = [0, 384], sizes = [8, 128], strides = [1, 1]} : vector<8x512xf32> to vector<8x128xf32>
    %241 = arith.negf %240 : vector<8x128xf32>
    %242 = math.exp %241 : vector<8x128xf32>
    %cst_42 = arith.constant 1.000000e+00 : f32
    %243 = vector.broadcast %cst_42 : f32 to vector<8x128xf32>
    %244 = arith.addf %243, %242 : vector<8x128xf32>
    %245 = arith.divf %243, %244 : vector<8x128xf32>
    %246 = arith.mulf %237, %218 : vector<8x128xf32>
    %247 = arith.mulf %231, %239 : vector<8x128xf32>
    %248 = arith.addf %246, %247 : vector<8x128xf32>
    %249 = math.tanh %248 : vector<8x128xf32>
    %250 = arith.mulf %245, %249 : vector<8x128xf32>
    %251 = arith.addf %221, %250 : vector<8x128xf32>
    %c0_43 = arith.constant 0 : index
    %c0_44 = arith.constant 0 : index
    %c0_45 = arith.constant 0 : index
    %252 = vector.load %arg2[%c0_43, %c0_44, %c0_45] : memref<8x49x512xf32, #tpu.memory_space<vmem>>, vector<8x49x512xf32>
    %cst_46 = arith.constant dense<0.000000e+00> : vector<8x512xf32>
    %253 = vector.multi_reduction <add>, %252, %cst_46 [1] : vector<8x49x512xf32> to vector<8x512xf32>
    %c0_47 = arith.constant 0 : index
    %c0_48 = arith.constant 0 : index
    %254 = vector.load %arg6[%c0_47, %c0_48] : memref<512x128xf32, #tpu.memory_space<vmem>>, vector<512x128xf32>
    %cst_49 = arith.constant dense<0.000000e+00> : vector<8x128xf32>
    %255 = tpu.matmul %253, %254, %cst_49 {dimension_numbers = #tpu.dot_dimension_numbers<[1], [0], [0], [1], [0, 0, 1, 1], [], []>} : vector<8x512xf32>, vector<512x128xf32>, vector<8x128xf32> -> vector<8x128xf32>
    %c0_50 = arith.constant 0 : index
    %c0_51 = arith.constant 0 : index
    %256 = vector.load %arg7[%c0_50, %c0_51] : memref<1x128xf32, #tpu.memory_space<vmem>>, vector<1x128xf32>
    %cst_52 = arith.constant 4.900000e+01 : f32
    %257 = vector.broadcast %cst_52 : f32 to vector<1x128xf32>
    %258 = arith.mulf %257, %256 : vector<1x128xf32>
    %259 = vector.broadcast %258 : vector<1x128xf32> to vector<8x128xf32>
    %260 = arith.addf %255, %259 : vector<8x128xf32>
    %261 = arith.addf %260, %251 : vector<8x128xf32>
    %c0_53 = arith.constant 0 : index
    %c0_54 = arith.constant 0 : index
    %262 = vector.load %arg8[%c0_53, %c0_54] : memref<128x2xf32, #tpu.memory_space<vmem>>, vector<128x2xf32>
    %cst_55 = arith.constant dense<0.000000e+00> : vector<8x2xf32>
    %263 = tpu.matmul %261, %262, %cst_55 {dimension_numbers = #tpu.dot_dimension_numbers<[1], [0], [0], [1], [0, 0, 1, 1], [], []>} : vector<8x128xf32>, vector<128x2xf32>, vector<8x2xf32> -> vector<8x2xf32>
    %c0_56 = arith.constant 0 : index
    %c0_57 = arith.constant 0 : index
    %264 = vector.load %arg9[%c0_56, %c0_57] : memref<1x2xf32, #tpu.memory_space<vmem>>, vector<1x2xf32>
    %265 = vector.broadcast %264 : vector<1x2xf32> to vector<8x2xf32>
    %266 = arith.addf %263, %265 : vector<8x2xf32>
    %c0_58 = arith.constant 0 : index
    %c0_59 = arith.constant 0 : index
    %267 = vector.load %arg10[%c0_58, %c0_59] : memref<8x2xf32, #tpu.memory_space<vmem>>, vector<8x2xf32>
    tpu.vector_store %arg10[%c0_58, %c0_59], %266 {strides = array<i32>} : memref<8x2xf32, #tpu.memory_space<vmem>>, vector<8x2xf32>,
    return
  }
  func.func @transform_0(%arg0: i32) -> (i32, i32, i32) {
    %c0_i32 = arith.constant 0 : i32
    %c0_i32_0 = arith.constant 0 : i32
    %c0_i32_1 = arith.constant 0 : i32
    return %c0_i32, %arg0, %c0_i32_0 : i32, i32, i32
  }
  func.func @transform_1(%arg0: i32) -> (i32, i32, i32) {
    %c0_i32 = arith.constant 0 : i32
    %c0_i32_0 = arith.constant 0 : i32
    %c0_i32_1 = arith.constant 0 : i32
    return %arg0, %c0_i32, %c0_i32_0 : i32, i32, i32
  }
  func.func @transform_2(%arg0: i32) -> (i32, i32) {
    %c0_i32 = arith.constant 0 : i32
    %c0_i32_0 = arith.constant 0 : i32
    %c0_i32_1 = arith.constant 0 : i32
    return %c0_i32, %c0_i32_0 : i32, i32
  }
  func.func @transform_3(%arg0: i32) -> (i32, i32) {
    %c0_i32 = arith.constant 0 : i32
    %c0_i32_0 = arith.constant 0 : i32
    %c0_i32_1 = arith.constant 0 : i32
    return %c0_i32, %c0_i32_0 : i32, i32
  }
  func.func @transform_4(%arg0: i32) -> (i32, i32) {
    %c0_i32 = arith.constant 0 : i32
    %c0_i32_0 = arith.constant 0 : i32
    %c0_i32_1 = arith.constant 0 : i32
    return %c0_i32, %c0_i32_0 : i32, i32
  }
  func.func @transform_5(%arg0: i32) -> (i32, i32) {
    %c0_i32 = arith.constant 0 : i32
    %c0_i32_0 = arith.constant 0 : i32
    %c0_i32_1 = arith.constant 0 : i32
    return %c0_i32, %c0_i32_0 : i32, i32
  }
  func.func @transform_6(%arg0: i32) -> (i32, i32) {
    %c0_i32 = arith.constant 0 : i32
    %c0_i32_0 = arith.constant 0 : i32
    %c0_i32_1 = arith.constant 0 : i32
    return %c0_i32, %c0_i32_0 : i32, i32
  }
  func.func @transform_7(%arg0: i32) -> (i32, i32) {
    %c0_i32 = arith.constant 0 : i32
    %c0_i32_0 = arith.constant 0 : i32
    %c0_i32_1 = arith.constant 0 : i32
    return %c0_i32, %c0_i32_0 : i32, i32
  }
  func.func @transform_8(%arg0: i32) -> (i32, i32) {
    %c0_i32 = arith.constant 0 : i32
    %c0_i32_0 = arith.constant 0 : i32
    %c0_i32_1 = arith.constant 0 : i32
    return %c0_i32, %c0_i32_0 : i32, i32
  }
  func.func @transform_9(%arg0: i32) -> (i32, i32) {
    %c0_i32 = arith.constant 0 : i32
    %c0_i32_0 = arith.constant 0 : i32
    return %arg0, %c0_i32 : i32, i32
  }
}

</mosaic_0001>

<llo_original>
// kernel: tpu_custom_call.1
$region0: #{tpu_custom_call.1}
  #allocation0 [shape = 'u32[]', space=smem, size = 0x4, offset = 0x4, fixed_abs, tag = 'smem constant byte address 0x4 - core index']
  #allocation1 [shape = 'u32[72,128]{1,0:T(1,128)}', space=vmem, size = 0x9000, scoped, tag = 'internal scratch']
  %s0 = inlined_call_operand.vmem [shape: f32[8,8,128], index: 0, kind: input, shape index: {}]
  %s1 = inlined_call_operand.vmem [shape: f32[8,49,512], index: 1, kind: input, shape index: {}]
  %s2 = inlined_call_operand.vmem [shape: f32[128,512], index: 2, kind: input, shape index: {}]
  %s3 = inlined_call_operand.vmem [shape: f32[128,512], index: 3, kind: input, shape index: {}]
  %s4 = inlined_call_operand.vmem [shape: f32[1,512], index: 4, kind: input, shape index: {}]
  %s5 = inlined_call_operand.vmem [shape: f32[512,128], index: 5, kind: input, shape index: {}]
  %s6 = inlined_call_operand.vmem [shape: f32[1,128], index: 6, kind: input, shape index: {}]
  %s7 = inlined_call_operand.vmem [shape: f32[128,2], index: 7, kind: input, shape index: {}]
  %s8 = inlined_call_operand.vmem [shape: f32[1,2], index: 8, kind: input, shape index: {}]
  %s9 = inlined_call_operand.vmem [shape: f32[8,2], index: 9, kind: output, shape index: {}]
  %s10 = sld [smem:[#allocation0]]
  $region46: #{tpu_custom_call.1} parent=0
    _
  %s12 = ssub.s32 1, %s10
  %s13 = scalar_select 0, %s12, %s10
  // Predicated region
  $region2: #{tpu_custom_call.1} parent=0 // pred_check
    _
  $region3: #{tpu_custom_call.1} parent=0 // pred_check_branch
    %15 = sbr.rel (0) target = $region5
  $region4: #{tpu_custom_call.1} parent=0 // pred_region
    _
  $region5: #{tpu_custom_call.1} parent=0 // pred_fallthru
    _
  // Predicated region
  $region6: #{tpu_custom_call.1} parent=0 // pred_check
    _
  $region7: #{tpu_custom_call.1} parent=0 // pred_check_branch
    %17 = sbr.rel (0) target = $region9
  $region8: #{tpu_custom_call.1} parent=0 // pred_region
    _
  $region9: #{tpu_custom_call.1} parent=0 // pred_fallthru
    _
  // Predicated region
  $region10: #{tpu_custom_call.1} parent=0 // pred_check
    _
  $region11: #{tpu_custom_call.1} parent=0 // pred_check_branch
    %19 = sbr.rel (0) target = $region13
  $region12: #{tpu_custom_call.1} parent=0 // pred_region
    _
  $region13: #{tpu_custom_call.1} parent=0 // pred_fallthru
    _
  // Predicated region
  $region14: #{tpu_custom_call.1} parent=0 // pred_check
    _
  $region15: #{tpu_custom_call.1} parent=0 // pred_check_branch
    %21 = sbr.rel (0) target = $region17
  $region16: #{tpu_custom_call.1} parent=0 // pred_region
    _
  $region17: #{tpu_custom_call.1} parent=0 // pred_fallthru
    _
  // Predicated region
  $region18: #{tpu_custom_call.1} parent=0 // pred_check
    _
  $region19: #{tpu_custom_call.1} parent=0 // pred_check_branch
    %23 = sbr.rel (0) target = $region21
  $region20: #{tpu_custom_call.1} parent=0 // pred_region
    _
  $region21: #{tpu_custom_call.1} parent=0 // pred_fallthru
    _
  // Predicated region
  $region22: #{tpu_custom_call.1} parent=0 // pred_check
    _
  $region23: #{tpu_custom_call.1} parent=0 // pred_check_branch
    %25 = sbr.rel (0) target = $region25
  $region24: #{tpu_custom_call.1} parent=0 // pred_region
    _
  $region25: #{tpu_custom_call.1} parent=0 // pred_fallthru
    _
  // Predicated region
  $region26: #{tpu_custom_call.1} parent=0 // pred_check
    _
  $region27: #{tpu_custom_call.1} parent=0 // pred_check_branch
    %27 = sbr.rel (0) target = $region29
  $region28: #{tpu_custom_call.1} parent=0 // pred_region
    _
  $region29: #{tpu_custom_call.1} parent=0 // pred_fallthru
    _
  // Predicated region
  $region30: #{tpu_custom_call.1} parent=0 // pred_check
    _
  $region31: #{tpu_custom_call.1} parent=0 // pred_check_branch
    %29 = sbr.rel (0) target = $region33
  $region32: #{tpu_custom_call.1} parent=0 // pred_region
    _
  $region33: #{tpu_custom_call.1} parent=0 // pred_fallthru
    _
  // Predicated region
  $region34: #{tpu_custom_call.1} parent=0 // pred_check
    _
  $region35: #{tpu_custom_call.1} parent=0 // pred_check_branch
    %31 = sbr.rel (0) target = $region37
  $region36: #{tpu_custom_call.1} parent=0 // pred_region
    _
  $region37: #{tpu_custom_call.1} parent=0 // pred_fallthru
    _
  %v32 = vld [vmem:[%s3] sm:$0xff]
  %v33 = vld [vmem:[%s3 + $0x8] sm:$0xff]
  %v34 = vld [vmem:[%s3 + $0x10] sm:$0xff]
  %v35 = vld [vmem:[%s3 + $0x18] sm:$0xff]
  %v36 = vld [vmem:[%s3 + $0x20] sm:$0xff]
  %v37 = vld [vmem:[%s3 + $0x28] sm:$0xff]
  %v38 = vld [vmem:[%s3 + $0x30] sm:$0xff]
  %v39 = vld [vmem:[%s3 + $0x38] sm:$0xff]
  %v40 = vld [vmem:[%s3 + $0x40] sm:$0xff]
  %v41 = vld [vmem:[%s3 + $0x48] sm:$0xff]
  %v42 = vld [vmem:[%s3 + $0x50] sm:$0xff]
  %v43 = vld [vmem:[%s3 + $0x58] sm:$0xff]
  %v44 = vld [vmem:[%s3 + $0x60] sm:$0xff]
  %v45 = vld [vmem:[%s3 + $0x68] sm:$0xff]
  %v46 = vld [vmem:[%s3 + $0x70] sm:$0xff]
  %v47 = vld [vmem:[%s3 + $0x78] sm:$0xff]
  %v48 = vld [vmem:[%s3 + $0x80] sm:$0xff]
  %v49 = vld [vmem:[%s3 + $0x88] sm:$0xff]
  %v50 = vld [vmem:[%s3 + $0x90] sm:$0xff]
  %v51 = vld [vmem:[%s3 + $0x98] sm:$0xff]
  %v52 = vld [vmem:[%s3 + $0xa0] sm:$0xff]
  %v53 = vld [vmem:[%s3 + $0xa8] sm:$0xff]
  %v54 = vld [vmem:[%s3 + $0xb0] sm:$0xff]
  %v55 = vld [vmem:[%s3 + $0xb8] sm:$0xff]
  %v56 = vld [vmem:[%s3 + $0xc0] sm:$0xff]
  %v57 = vld [vmem:[%s3 + $0xc8] sm:$0xff]
  %v58 = vld [vmem:[%s3 + $0xd0] sm:$0xff]
  %v59 = vld [vmem:[%s3 + $0xd8] sm:$0xff]
  %v60 = vld [vmem:[%s3 + $0xe0] sm:$0xff]
  %v61 = vld [vmem:[%s3 + $0xe8] sm:$0xff]
  %v62 = vld [vmem:[%s3 + $0xf0] sm:$0xff]
  %v63 = vld [vmem:[%s3 + $0xf8] sm:$0xff]
  %v64 = vld [vmem:[%s3 + $0x100] sm:$0xff]
  %v65 = vld [vmem:[%s3 + $0x108] sm:$0xff]
  %v66 = vld [vmem:[%s3 + $0x110] sm:$0xff]
  %v67 = vld [vmem:[%s3 + $0x118] sm:$0xff]
  %v68 = vld [vmem:[%s3 + $0x120] sm:$0xff]
  %v69 = vld [vmem:[%s3 + $0x128] sm:$0xff]
  %v70 = vld [vmem:[%s3 + $0x130] sm:$0xff]
  %v71 = vld [vmem:[%s3 + $0x138] sm:$0xff]
  %v72 = vld [vmem:[%s3 + $0x140] sm:$0xff]
  %v73 = vld [vmem:[%s3 + $0x148] sm:$0xff]
  %v74 = vld [vmem:[%s3 + $0x150] sm:$0xff]
  %v75 = vld [vmem:[%s3 + $0x158] sm:$0xff]
  %v76 = vld [vmem:[%s3 + $0x160] sm:$0xff]
  %v77 = vld [vmem:[%s3 + $0x168] sm:$0xff]
  %v78 = vld [vmem:[%s3 + $0x170] sm:$0xff]
  %v79 = vld [vmem:[%s3 + $0x178] sm:$0xff]
  %v80 = vld [vmem:[%s3 + $0x180] sm:$0xff]
  %v81 = vld [vmem:[%s3 + $0x188] sm:$0xff]
  %v82 = vld [vmem:[%s3 + $0x190] sm:$0xff]
  %v83 = vld [vmem:[%s3 + $0x198] sm:$0xff]
  %v84 = vld [vmem:[%s3 + $0x1a0] sm:$0xff]
  %v85 = vld [vmem:[%s3 + $0x1a8] sm:$0xff]
  %v86 = vld [vmem:[%s3 + $0x1b0] sm:$0xff]
  %v87 = vld [vmem:[%s3 + $0x1b8] sm:$0xff]
  %v88 = vld [vmem:[%s3 + $0x1c0] sm:$0xff]
  %v89 = vld [vmem:[%s3 + $0x1c8] sm:$0xff]
  %v90 = vld [vmem:[%s3 + $0x1d0] sm:$0xff]
  %v91 = vld [vmem:[%s3 + $0x1d8] sm:$0xff]
  %v92 = vld [vmem:[%s3 + $0x1e0] sm:$0xff]
  %v93 = vld [vmem:[%s3 + $0x1e8] sm:$0xff]
  %v94 = vld [vmem:[%s3 + $0x1f0] sm:$0xff]
  %v95 = vld [vmem:[%s3 + $0x1f8] sm:$0xff]
  %v96 = vld [vmem:[%s4] sm:$0xf]
  %v97 = vld [vmem:[%s0] sm:$0xff]
  %v98 = vld [vmem:[%s0 + $0x8] sm:$0xff]
  %v99 = vld [vmem:[%s0 + $0x10] sm:$0xff]
  %v100 = vld [vmem:[%s0 + $0x18] sm:$0xff]
  %v101 = vld [vmem:[%s0 + $0x20] sm:$0xff]
  %v102 = vld [vmem:[%s0 + $0x28] sm:$0xff]
  %v103 = vld [vmem:[%s0 + $0x30] sm:$0xff]
  %v104 = vld [vmem:[%s0 + $0x38] sm:$0xff]
  %v105 = vld [vmem:[%s2] sm:$0xff]
  %v106 = vld [vmem:[%s2 + $0x8] sm:$0xff]
  %v107 = vld [vmem:[%s2 + $0x10] sm:$0xff]
  %v108 = vld [vmem:[%s2 + $0x18] sm:$0xff]
  %v109 = vld [vmem:[%s2 + $0x20] sm:$0xff]
  %v110 = vld [vmem:[%s2 + $0x28] sm:$0xff]
  %v111 = vld [vmem:[%s2 + $0x30] sm:$0xff]
  %v112 = vld [vmem:[%s2 + $0x38] sm:$0xff]
  %v113 = vld [vmem:[%s2 + $0x40] sm:$0xff]
  %v114 = vld [vmem:[%s2 + $0x48] sm:$0xff]
  %v115 = vld [vmem:[%s2 + $0x50] sm:$0xff]
  %v116 = vld [vmem:[%s2 + $0x58] sm:$0xff]
  %v117 = vld [vmem:[%s2 + $0x60] sm:$0xff]
  %v118 = vld [vmem:[%s2 + $0x68] sm:$0xff]
  %v119 = vld [vmem:[%s2 + $0x70] sm:$0xff]
  %v120 = vld [vmem:[%s2 + $0x78] sm:$0xff]
  %v121 = vld [vmem:[%s2 + $0x80] sm:$0xff]
  %v122 = vld [vmem:[%s2 + $0x88] sm:$0xff]
  %v123 = vld [vmem:[%s2 + $0x90] sm:$0xff]
  %v124 = vld [vmem:[%s2 + $0x98] sm:$0xff]
  %v125 = vld [vmem:[%s2 + $0xa0] sm:$0xff]
  %v126 = vld [vmem:[%s2 + $0xa8] sm:$0xff]
  %v127 = vld [vmem:[%s2 + $0xb0] sm:$0xff]
  %v128 = vld [vmem:[%s2 + $0xb8] sm:$0xff]
  %v129 = vld [vmem:[%s2 + $0xc0] sm:$0xff]
  %v130 = vld [vmem:[%s2 + $0xc8] sm:$0xff]
  %v131 = vld [vmem:[%s2 + $0xd0] sm:$0xff]
  %v132 = vld [vmem:[%s2 + $0xd8] sm:$0xff]
  %v133 = vld [vmem:[%s2 + $0xe0] sm:$0xff]
  %v134 = vld [vmem:[%s2 + $0xe8] sm:$0xff]
  %v135 = vld [vmem:[%s2 + $0xf0] sm:$0xff]
  %v136 = vld [vmem:[%s2 + $0xf8] sm:$0xff]
  %v137 = vld [vmem:[%s2 + $0x100] sm:$0xff]
  %v138 = vld [vmem:[%s2 + $0x108] sm:$0xff]
  %v139 = vld [vmem:[%s2 + $0x110] sm:$0xff]
  %v140 = vld [vmem:[%s2 + $0x118] sm:$0xff]
  %v141 = vld [vmem:[%s2 + $0x120] sm:$0xff]
  %v142 = vld [vmem:[%s2 + $0x128] sm:$0xff]
  %v143 = vld [vmem:[%s2 + $0x130] sm:$0xff]
  %v144 = vld [vmem:[%s2 + $0x138] sm:$0xff]
  %v145 = vld [vmem:[%s2 + $0x140] sm:$0xff]
  %v146 = vld [vmem:[%s2 + $0x148] sm:$0xff]
  %v147 = vld [vmem:[%s2 + $0x150] sm:$0xff]
  %v148 = vld [vmem:[%s2 + $0x158] sm:$0xff]
  %v149 = vld [vmem:[%s2 + $0x160] sm:$0xff]
  %v150 = vld [vmem:[%s2 + $0x168] sm:$0xff]
  %v151 = vld [vmem:[%s2 + $0x170] sm:$0xff]
  %v152 = vld [vmem:[%s2 + $0x178] sm:$0xff]
  %v153 = vld [vmem:[%s2 + $0x180] sm:$0xff]
  %v154 = vld [vmem:[%s2 + $0x188] sm:$0xff]
  %v155 = vld [vmem:[%s2 + $0x190] sm:$0xff]
  %v156 = vld [vmem:[%s2 + $0x198] sm:$0xff]
  %v157 = vld [vmem:[%s2 + $0x1a0] sm:$0xff]
  %v158 = vld [vmem:[%s2 + $0x1a8] sm:$0xff]
  %v159 = vld [vmem:[%s2 + $0x1b0] sm:$0xff]
  %v160 = vld [vmem:[%s2 + $0x1b8] sm:$0xff]
  %v161 = vld [vmem:[%s2 + $0x1c0] sm:$0xff]
  %v162 = vld [vmem:[%s2 + $0x1c8] sm:$0xff]
  %v163 = vld [vmem:[%s2 + $0x1d0] sm:$0xff]
  %v164 = vld [vmem:[%s2 + $0x1d8] sm:$0xff]
  %v165 = vld [vmem:[%s2 + $0x1e0] sm:$0xff]
  %v166 = vld [vmem:[%s2 + $0x1e8] sm:$0xff]
  %v167 = vld [vmem:[%s2 + $0x1f0] sm:$0xff]
  %v168 = vld [vmem:[%s2 + $0x1f8] sm:$0xff]
  %v170 = vperm.slane %v96, 0
  %v171 = vperm.slane %v96, 1
  %v172 = vperm.slane %v96, 2
  %v173 = vperm.slane %v96, 3
  %178 = vmatpush.msra.mxu0 %v165
  %179 = vmatpush.msra.mxu0 %v161
  %180 = vmatpush.msra.mxu0 %v157
  %181 = vmatpush.msra.mxu0 %v153
  %182 = vmatpush.msra.mxu0 %v149
  %183 = vmatpush.msra.mxu0 %v145
  %184 = vmatpush.msra.mxu0 %v141
  %185 = vmatpush.msra.mxu0 %v137
  %186 = vmatpush.msra.mxu0 %v133
  %187 = vmatpush.msra.mxu0 %v129
  %188 = vmatpush.msra.mxu0 %v125
  %189 = vmatpush.msra.mxu0 %v121
  %190 = vmatpush.msra.mxu0 %v117
  %191 = vmatpush.msra.mxu0 %v113
  %192 = vmatpush.msra.mxu0 %v109
  %193 = vmatpush.msra.mxu0 %v105
  %194 = vmatmul.f32.gmra.mxu0 %v97
  %v195 = vpop.f32.mrf.mxu0
  %v196 = vadd.f32 %v170, %v195
  %197 = vmatmul.f32.gmra.mxu0 %v98
  %v198 = vpop.f32.mrf.mxu0
  %v199 = vadd.f32 %v170, %v198
  %200 = vmatmul.f32.gmra.mxu0 %v99
  %v201 = vpop.f32.mrf.mxu0
  %v202 = vadd.f32 %v170, %v201
  %203 = vmatmul.f32.gmra.mxu0 %v100
  %v204 = vpop.f32.mrf.mxu0
  %v205 = vadd.f32 %v170, %v204
  %206 = vmatmul.f32.gmra.mxu0 %v101
  %v207 = vpop.f32.mrf.mxu0
  %v208 = vadd.f32 %v170, %v207
  %209 = vmatmul.f32.gmra.mxu0 %v102
  %v210 = vpop.f32.mrf.mxu0
  %v211 = vadd.f32 %v170, %v210
  %212 = vmatmul.f32.gmra.mxu0 %v103
  %v213 = vpop.f32.mrf.mxu0
  %v214 = vadd.f32 %v170, %v213
  %215 = vmatmul.f32.gmra.mxu0 %v104
  %v216 = vpop.f32.mrf.mxu0
  %v217 = vadd.f32 %v170, %v216
  %218 = vdwg.mxu0
  %219 = vmatpush.msra.mxu0 %v166
  %220 = vmatpush.msra.mxu0 %v162
  %221 = vmatpush.msra.mxu0 %v158
  %222 = vmatpush.msra.mxu0 %v154
  %223 = vmatpush.msra.mxu0 %v150
  %224 = vmatpush.msra.mxu0 %v146
  %225 = vmatpush.msra.mxu0 %v142
  %226 = vmatpush.msra.mxu0 %v138
  %227 = vmatpush.msra.mxu0 %v134
  %228 = vmatpush.msra.mxu0 %v130
  %229 = vmatpush.msra.mxu0 %v126
  %230 = vmatpush.msra.mxu0 %v122
  %231 = vmatpush.msra.mxu0 %v118
  %232 = vmatpush.msra.mxu0 %v114
  %233 = vmatpush.msra.mxu0 %v110
  %234 = vmatpush.msra.mxu0 %v106
  %235 = vmatmul.f32.gmra.mxu0 %v97
  %v236 = vpop.f32.mrf.mxu0
  %v237 = vadd.f32 %v171, %v236
  %238 = vmatmul.f32.gmra.mxu0 %v98
  %v239 = vpop.f32.mrf.mxu0
  %v240 = vadd.f32 %v171, %v239
  %241 = vmatmul.f32.gmra.mxu0 %v99
  %v242 = vpop.f32.mrf.mxu0
  %v243 = vadd.f32 %v171, %v242
  %244 = vmatmul.f32.gmra.mxu0 %v100
  %v245 = vpop.f32.mrf.mxu0
  %v246 = vadd.f32 %v171, %v245
  %247 = vmatmul.f32.gmra.mxu0 %v101
  %v248 = vpop.f32.mrf.mxu0
  %v249 = vadd.f32 %v171, %v248
  %250 = vmatmul.f32.gmra.mxu0 %v102
  %v251 = vpop.f32.mrf.mxu0
  %v252 = vadd.f32 %v171, %v251
  %253 = vmatmul.f32.gmra.mxu0 %v103
  %v254 = vpop.f32.mrf.mxu0
  %v255 = vadd.f32 %v171, %v254
  %256 = vmatmul.f32.gmra.mxu0 %v104
  %v257 = vpop.f32.mrf.mxu0
  %v258 = vadd.f32 %v171, %v257
  %259 = vdwg.mxu0
  %260 = vmatpush.msra.mxu0 %v167
  %261 = vmatpush.msra.mxu0 %v163
  %262 = vmatpush.msra.mxu0 %v159
  %263 = vmatpush.msra.mxu0 %v155
  %264 = vmatpush.msra.mxu0 %v151
  %265 = vmatpush.msra.mxu0 %v147
  %266 = vmatpush.msra.mxu0 %v143
  %267 = vmatpush.msra.mxu0 %v139
  %268 = vmatpush.msra.mxu0 %v135
  %269 = vmatpush.msra.mxu0 %v131
  %270 = vmatpush.msra.mxu0 %v127
  %271 = vmatpush.msra.mxu0 %v123
  %272 = vmatpush.msra.mxu0 %v119
  %273 = vmatpush.msra.mxu0 %v115
  %274 = vmatpush.msra.mxu0 %v111
  %275 = vmatpush.msra.mxu0 %v107
  %276 = vmatmul.f32.gmra.mxu0 %v97
  %v277 = vpop.f32.mrf.mxu0
  %v278 = vadd.f32 %v172, %v277
  %279 = vmatmul.f32.gmra.mxu0 %v98
  %v280 = vpop.f32.mrf.mxu0
  %v281 = vadd.f32 %v172, %v280
  %282 = vmatmul.f32.gmra.mxu0 %v99
  %v283 = vpop.f32.mrf.mxu0
  %v284 = vadd.f32 %v172, %v283
  %285 = vmatmul.f32.gmra.mxu0 %v100
  %v286 = vpop.f32.mrf.mxu0
  %v287 = vadd.f32 %v172, %v286
  %288 = vmatmul.f32.gmra.mxu0 %v101
  %v289 = vpop.f32.mrf.mxu0
  %v290 = vadd.f32 %v172, %v289
  %291 = vmatmul.f32.gmra.mxu0 %v102
  %v292 = vpop.f32.mrf.mxu0
  %v293 = vadd.f32 %v172, %v292
  %294 = vmatmul.f32.gmra.mxu0 %v103
  %v295 = vpop.f32.mrf.mxu0
  %v296 = vadd.f32 %v172, %v295
  %297 = vmatmul.f32.gmra.mxu0 %v104
  %v298 = vpop.f32.mrf.mxu0
  %v299 = vadd.f32 %v172, %v298
  %300 = vdwg.mxu0
  %301 = vmatpush.msra.mxu0 %v168
  %302 = vmatpush.msra.mxu0 %v164
  %303 = vmatpush.msra.mxu0 %v160
  %304 = vmatpush.msra.mxu0 %v156
  %305 = vmatpush.msra.mxu0 %v152
  %306 = vmatpush.msra.mxu0 %v148
  %307 = vmatpush.msra.mxu0 %v144
  %308 = vmatpush.msra.mxu0 %v140
  %309 = vmatpush.msra.mxu0 %v136
  %310 = vmatpush.msra.mxu0 %v132
  %311 = vmatpush.msra.mxu0 %v128
  %312 = vmatpush.msra.mxu0 %v124
  %313 = vmatpush.msra.mxu0 %v120
  %314 = vmatpush.msra.mxu0 %v116
  %315 = vmatpush.msra.mxu0 %v112
  %316 = vmatpush.msra.mxu0 %v108
  %317 = vmatmul.f32.gmra.mxu0 %v97
  %v318 = vpop.f32.mrf.mxu0
  %v319 = vadd.f32 %v173, %v318
  %320 = vmatmul.f32.gmra.mxu0 %v98
  %v321 = vpop.f32.mrf.mxu0
  %v322 = vadd.f32 %v173, %v321
  %323 = vmatmul.f32.gmra.mxu0 %v99
  %v324 = vpop.f32.mrf.mxu0
  %v325 = vadd.f32 %v173, %v324
  %326 = vmatmul.f32.gmra.mxu0 %v100
  %v327 = vpop.f32.mrf.mxu0
  %v328 = vadd.f32 %v173, %v327
  %329 = vmatmul.f32.gmra.mxu0 %v101
  %v330 = vpop.f32.mrf.mxu0
  %v331 = vadd.f32 %v173, %v330
  %332 = vmatmul.f32.gmra.mxu0 %v102
  %v333 = vpop.f32.mrf.mxu0
  %v334 = vadd.f32 %v173, %v333
  %335 = vmatmul.f32.gmra.mxu0 %v103
  %v336 = vpop.f32.mrf.mxu0
  %v337 = vadd.f32 %v173, %v336
  %338 = vmatmul.f32.gmra.mxu0 %v104
  %v339 = vpop.f32.mrf.mxu0
  %v340 = vadd.f32 %v173, %v339
  %341 = vdwg.mxu0
  %342 = vmatpush.msra.mxu0 %v92
  %343 = vmatpush.msra.mxu0 %v88
  %344 = vmatpush.msra.mxu0 %v84
  %345 = vmatpush.msra.mxu0 %v80
  %346 = vmatpush.msra.mxu0 %v76
  %347 = vmatpush.msra.mxu0 %v72
  %348 = vmatpush.msra.mxu0 %v68
  %349 = vmatpush.msra.mxu0 %v64
  %350 = vmatpush.msra.mxu0 %v60
  %351 = vmatpush.msra.mxu0 %v56
  %352 = vmatpush.msra.mxu0 %v52
  %353 = vmatpush.msra.mxu0 %v48
  %354 = vmatpush.msra.mxu0 %v44
  %355 = vmatpush.msra.mxu0 %v40
  %356 = vmatpush.msra.mxu0 %v36
  %357 = vmatpush.msra.mxu0 %v32
  %358 = vmatmul.f32.gmra.mxu0 0.0
  %v359 = vpop.f32.mrf.mxu0
  %v360 = vadd.f32 0.0, %v359
  %361 = vdwg.mxu0
  %362 = vmatpush.msra.mxu0 %v93
  %363 = vmatpush.msra.mxu0 %v89
  %364 = vmatpush.msra.mxu0 %v85
  %365 = vmatpush.msra.mxu0 %v81
  %366 = vmatpush.msra.mxu0 %v77
  %367 = vmatpush.msra.mxu0 %v73
  %368 = vmatpush.msra.mxu0 %v69
  %369 = vmatpush.msra.mxu0 %v65
  %370 = vmatpush.msra.mxu0 %v61
  %371 = vmatpush.msra.mxu0 %v57
  %372 = vmatpush.msra.mxu0 %v53
  %373 = vmatpush.msra.mxu0 %v49
  %374 = vmatpush.msra.mxu0 %v45
  %375 = vmatpush.msra.mxu0 %v41
  %376 = vmatpush.msra.mxu0 %v37
  %377 = vmatpush.msra.mxu0 %v33
  %378 = vmatmul.f32.gmra.mxu0 0.0
  %v379 = vpop.f32.mrf.mxu0
  %v380 = vadd.f32 0.0, %v379
  %381 = vdwg.mxu0
  %382 = vmatpush.msra.mxu0 %v94
  %383 = vmatpush.msra.mxu0 %v90
  %384 = vmatpush.msra.mxu0 %v86
  %385 = vmatpush.msra.mxu0 %v82
  %386 = vmatpush.msra.mxu0 %v78
  %387 = vmatpush.msra.mxu0 %v74
  %388 = vmatpush.msra.mxu0 %v70
  %389 = vmatpush.msra.mxu0 %v66
  %390 = vmatpush.msra.mxu0 %v62
  %391 = vmatpush.msra.mxu0 %v58
  %392 = vmatpush.msra.mxu0 %v54
  %393 = vmatpush.msra.mxu0 %v50
  %394 = vmatpush.msra.mxu0 %v46
  %395 = vmatpush.msra.mxu0 %v42
  %396 = vmatpush.msra.mxu0 %v38
  %397 = vmatpush.msra.mxu0 %v34
  %398 = vmatmul.f32.gmra.mxu0 0.0
  %v399 = vpop.f32.mrf.mxu0
  %v400 = vadd.f32 0.0, %v399
  %401 = vdwg.mxu0
  %402 = vmatpush.msra.mxu0 %v95
  %403 = vmatpush.msra.mxu0 %v91
  %404 = vmatpush.msra.mxu0 %v87
  %405 = vmatpush.msra.mxu0 %v83
  %406 = vmatpush.msra.mxu0 %v79
  %407 = vmatpush.msra.mxu0 %v75
  %408 = vmatpush.msra.mxu0 %v71
  %409 = vmatpush.msra.mxu0 %v67
  %410 = vmatpush.msra.mxu0 %v63
  %411 = vmatpush.msra.mxu0 %v59
  %412 = vmatpush.msra.mxu0 %v55
  %413 = vmatpush.msra.mxu0 %v51
  %414 = vmatpush.msra.mxu0 %v47
  %415 = vmatpush.msra.mxu0 %v43
  %416 = vmatpush.msra.mxu0 %v39
  %417 = vmatpush.msra.mxu0 %v35
  %418 = vmatmul.f32.gmra.mxu0 0.0
  %v419 = vpop.f32.mrf.mxu0
  %v420 = vadd.f32 0.0, %v419
  %421 = vdwg.mxu0
  %v422 = vadd.f32 %v196, %v360
  %v423 = vadd.f32 %v237, %v380
  %v424 = vadd.f32 %v278, %v400
  %v425 = vadd.f32 %v319, %v420
  %v426 = vxor.u32 %v422, 2147483648
  %v427 = vmul.f32 %v426, 1.442695
  %v428 = vpow.pop %v427
  %v429 = vadd.f32 %v428, 1.0
  %v430 = vrcp.pop %v429
  %v431 = vmul.f32 %v429, %v430
  %v432 = vsub.f32 1.0, %v431
  %v433 = vmul.f32 %v430, %v432
  %v434 = vadd.f32 %v430, %v433
  %vm435 = vweird.f32 %v429
  %vm436 = vweird.f32 %v430
  %vm437 = vmor %vm435, %vm436
  %v438 = vsel %vm437, %v430, %v434
  %v439 = vand.u32 2147483647, %v429
  %vm440 = vcmp.eq.f32.partialorder %v439, 8.507059e+37
  %v441 = vand.u32 %v429, 2147483648
  %v442 = vor.u32 1.1754944e-38, %v441
  %v443 = vsel %vm440, %v442, %v438
  %v444 = vmul.f32 1.0, %v443
  %v445 = vxor.u32 %v423, 2147483648
  %v446 = vmul.f32 %v445, 1.442695
  %v447 = vpow.pop %v446
  %v448 = vadd.f32 %v447, 1.0
  %v449 = vrcp.pop %v448
  %v450 = vmul.f32 %v448, %v449
  %v451 = vsub.f32 1.0, %v450
  %v452 = vmul.f32 %v449, %v451
  %v453 = vadd.f32 %v449, %v452
  %vm454 = vweird.f32 %v448
  %vm455 = vweird.f32 %v449
  %vm456 = vmor %vm454, %vm455
  %v457 = vsel %vm456, %v449, %v453
  %v458 = vand.u32 2147483647, %v448
  %vm459 = vcmp.eq.f32.partialorder %v458, 8.507059e+37
  %v460 = vand.u32 %v448, 2147483648
  %v461 = vor.u32 1.1754944e-38, %v460
  %v462 = vsel %vm459, %v461, %v457
  %v463 = vmul.f32 1.0, %v462
  %v464 = vtanh.pop %v424
  %v465 = vxor.u32 %v425, 2147483648
  %v466 = vmul.f32 %v465, 1.442695
  %v467 = vpow.pop %v466
  %v468 = vadd.f32 %v467, 1.0
  %v469 = vrcp.pop %v468
  %v470 = vmul.f32 %v468, %v469
  %v471 = vsub.f32 1.0, %v470
  %v472 = vmul.f32 %v469, %v471
  %v473 = vadd.f32 %v469, %v472
  %vm474 = vweird.f32 %v468
  %vm475 = vweird.f32 %v469
  %vm476 = vmor %vm474, %vm475
  %v477 = vsel %vm476, %v469, %v473
  %v478 = vand.u32 2147483647, %v468
  %vm479 = vcmp.eq.f32.partialorder %v478, 8.507059e+37
  %v480 = vand.u32 %v468, 2147483648
  %v481 = vor.u32 1.1754944e-38, %v480
  %v482 = vsel %vm479, %v481, %v477
  %v483 = vmul.f32 1.0, %v482
  %v484 = vmul.f32 %v463, 0.0
  %v485 = vmul.f32 %v444, %v464
  %v486 = vadd.f32 %v484, %v485
  %v487 = vtanh.pop %v486
  %v488 = vmul.f32 %v483, %v487
  %v489 = vadd.f32 %v488, 0.0
  %490 = vmatpush.msra.mxu0 %v92
  %491 = vmatpush.msra.mxu0 %v88
  %492 = vmatpush.msra.mxu0 %v84
  %493 = vmatpush.msra.mxu0 %v80
  %494 = vmatpush.msra.mxu0 %v76
  %495 = vmatpush.msra.mxu0 %v72
  %496 = vmatpush.msra.mxu0 %v68
  %497 = vmatpush.msra.mxu0 %v64
  %498 = vmatpush.msra.mxu0 %v60
  %499 = vmatpush.msra.mxu0 %v56
  %500 = vmatpush.msra.mxu0 %v52
  %501 = vmatpush.msra.mxu0 %v48
  %502 = vmatpush.msra.mxu0 %v44
  %503 = vmatpush.msra.mxu0 %v40
  %504 = vmatpush.msra.mxu0 %v36
  %505 = vmatpush.msra.mxu0 %v32
  %506 = vmatmul.f32.gmra.mxu0 %v488
  %v507 = vpop.f32.mrf.mxu0
  %v508 = vadd.f32 0.0, %v507
  %509 = vdwg.mxu0
  %510 = vmatpush.msra.mxu0 %v93
  %511 = vmatpush.msra.mxu0 %v89
  %512 = vmatpush.msra.mxu0 %v85
  %513 = vmatpush.msra.mxu0 %v81
  %514 = vmatpush.msra.mxu0 %v77
  %515 = vmatpush.msra.mxu0 %v73
  %516 = vmatpush.msra.mxu0 %v69
  %517 = vmatpush.msra.mxu0 %v65
  %518 = vmatpush.msra.mxu0 %v61
  %519 = vmatpush.msra.mxu0 %v57
  %520 = vmatpush.msra.mxu0 %v53
  %521 = vmatpush.msra.mxu0 %v49
  %522 = vmatpush.msra.mxu0 %v45
  %523 = vmatpush.msra.mxu0 %v41
  %524 = vmatpush.msra.mxu0 %v37
  %525 = vmatpush.msra.mxu0 %v33
  %526 = vmatmul.f32.gmra.mxu0 %v488
  %v527 = vpop.f32.mrf.mxu0
  %v528 = vadd.f32 0.0, %v527
  %529 = vdwg.mxu0
  %530 = vmatpush.msra.mxu0 %v94
  %531 = vmatpush.msra.mxu0 %v90
  %532 = vmatpush.msra.mxu0 %v86
  %533 = vmatpush.msra.mxu0 %v82
  %534 = vmatpush.msra.mxu0 %v78
  %535 = vmatpush.msra.mxu0 %v74
  %536 = vmatpush.msra.mxu0 %v70
  %537 = vmatpush.msra.mxu0 %v66
  %538 = vmatpush.msra.mxu0 %v62
  %539 = vmatpush.msra.mxu0 %v58
  %540 = vmatpush.msra.mxu0 %v54
  %541 = vmatpush.msra.mxu0 %v50
  %542 = vmatpush.msra.mxu0 %v46
  %543 = vmatpush.msra.mxu0 %v42
  %544 = vmatpush.msra.mxu0 %v38
  %545 = vmatpush.msra.mxu0 %v34
  %546 = vmatmul.f32.gmra.mxu0 %v488
  %v547 = vpop.f32.mrf.mxu0
  %v548 = vadd.f32 0.0, %v547
  %549 = vdwg.mxu0
  %550 = vmatpush.msra.mxu0 %v95
  %551 = vmatpush.msra.mxu0 %v91
  %552 = vmatpush.msra.mxu0 %v87
  %553 = vmatpush.msra.mxu0 %v83
  %554 = vmatpush.msra.mxu0 %v79
  %555 = vmatpush.msra.mxu0 %v75
  %556 = vmatpush.msra.mxu0 %v71
  %557 = vmatpush.msra.mxu0 %v67
  %558 = vmatpush.msra.mxu0 %v63
  %559 = vmatpush.msra.mxu0 %v59
  %560 = vmatpush.msra.mxu0 %v55
  %561 = vmatpush.msra.mxu0 %v51
  %562 = vmatpush.msra.mxu0 %v47
  %563 = vmatpush.msra.mxu0 %v43
  %564 = vmatpush.msra.mxu0 %v39
  %565 = vmatpush.msra.mxu0 %v35
  %566 = vmatmul.f32.gmra.mxu0 %v488
  %v567 = vpop.f32.mrf.mxu0
  %v568 = vadd.f32 0.0, %v567
  %569 = vdwg.mxu0
  %v570 = vadd.f32 %v199, %v508
  %v571 = vadd.f32 %v240, %v528
  %v572 = vadd.f32 %v281, %v548
  %v573 = vadd.f32 %v322, %v568
  %v574 = vxor.u32 %v570, 2147483648
  %v575 = vmul.f32 %v574, 1.442695
  %v576 = vpow.pop %v575
  %v577 = vadd.f32 %v576, 1.0
  %v578 = vrcp.pop %v577
  %v579 = vmul.f32 %v577, %v578
  %v580 = vsub.f32 1.0, %v579
  %v581 = vmul.f32 %v578, %v580
  %v582 = vadd.f32 %v578, %v581
  %vm583 = vweird.f32 %v577
  %vm584 = vweird.f32 %v578
  %vm585 = vmor %vm583, %vm584
  %v586 = vsel %vm585, %v578, %v582
  %v587 = vand.u32 2147483647, %v577
  %vm588 = vcmp.eq.f32.partialorder %v587, 8.507059e+37
  %v589 = vand.u32 %v577, 2147483648
  %v590 = vor.u32 1.1754944e-38, %v589
  %v591 = vsel %vm588, %v590, %v586
  %v592 = vmul.f32 1.0, %v591
  %v593 = vxor.u32 %v571, 2147483648
  %v594 = vmul.f32 %v593, 1.442695
  %v595 = vpow.pop %v594
  %v596 = vadd.f32 %v595, 1.0
  %v597 = vrcp.pop %v596
  %v598 = vmul.f32 %v596, %v597
  %v599 = vsub.f32 1.0, %v598
  %v600 = vmul.f32 %v597, %v599
  %v601 = vadd.f32 %v597, %v600
  %vm602 = vweird.f32 %v596
  %vm603 = vweird.f32 %v597
  %vm604 = vmor %vm602, %vm603
  %v605 = vsel %vm604, %v597, %v601
  %v606 = vand.u32 2147483647, %v596
  %vm607 = vcmp.eq.f32.partialorder %v606, 8.507059e+37
  %v608 = vand.u32 %v596, 2147483648
  %v609 = vor.u32 1.1754944e-38, %v608
  %v610 = vsel %vm607, %v609, %v605
  %v611 = vmul.f32 1.0, %v610
  %v612 = vtanh.pop %v572
  %v613 = vxor.u32 %v573, 2147483648
  %v614 = vmul.f32 %v613, 1.442695
  %v615 = vpow.pop %v614
  %v616 = vadd.f32 %v615, 1.0
  %v617 = vrcp.pop %v616
  %v618 = vmul.f32 %v616, %v617
  %v619 = vsub.f32 1.0, %v618
  %v620 = vmul.f32 %v617, %v619
  %v621 = vadd.f32 %v617, %v620
  %vm622 = vweird.f32 %v616
  %vm623 = vweird.f32 %v617
  %vm624 = vmor %vm622, %vm623
  %v625 = vsel %vm624, %v617, %v621
  %v626 = vand.u32 2147483647, %v616
  %vm627 = vcmp.eq.f32.partialorder %v626, 8.507059e+37
  %v628 = vand.u32 %v616, 2147483648
  %v629 = vor.u32 1.1754944e-38, %v628
  %v630 = vsel %vm627, %v629, %v625
  %v631 = vmul.f32 1.0, %v630
  %v632 = vmul.f32 %v611, %v486
  %v633 = vmul.f32 %v592, %v612
  %v634 = vadd.f32 %v632, %v633
  %v635 = vtanh.pop %v634
  %v636 = vmul.f32 %v631, %v635
  %v637 = vadd.f32 %v489, %v636
  %638 = vmatpush.msra.mxu0 %v92
  %639 = vmatpush.msra.mxu0 %v88
  %640 = vmatpush.msra.mxu0 %v84
  %641 = vmatpush.msra.mxu0 %v80
  %642 = vmatpush.msra.mxu0 %v76
  %643 = vmatpush.msra.mxu0 %v72
  %644 = vmatpush.msra.mxu0 %v68
  %645 = vmatpush.msra.mxu0 %v64
  %646 = vmatpush.msra.mxu0 %v60
  %647 = vmatpush.msra.mxu0 %v56
  %648 = vmatpush.msra.mxu0 %v52
  %649 = vmatpush.msra.mxu0 %v48
  %650 = vmatpush.msra.mxu0 %v44
  %651 = vmatpush.msra.mxu0 %v40
  %652 = vmatpush.msra.mxu0 %v36
  %653 = vmatpush.msra.mxu0 %v32
  %654 = vmatmul.f32.gmra.mxu0 %v636
  %v655 = vpop.f32.mrf.mxu0
  %v656 = vadd.f32 0.0, %v655
  %657 = vdwg.mxu0
  %658 = vmatpush.msra.mxu0 %v93
  %659 = vmatpush.msra.mxu0 %v89
  %660 = vmatpush.msra.mxu0 %v85
  %661 = vmatpush.msra.mxu0 %v81
  %662 = vmatpush.msra.mxu0 %v77
  %663 = vmatpush.msra.mxu0 %v73
  %664 = vmatpush.msra.mxu0 %v69
  %665 = vmatpush.msra.mxu0 %v65
  %666 = vmatpush.msra.mxu0 %v61
  %667 = vmatpush.msra.mxu0 %v57
  %668 = vmatpush.msra.mxu0 %v53
  %669 = vmatpush.msra.mxu0 %v49
  %670 = vmatpush.msra.mxu0 %v45
  %671 = vmatpush.msra.mxu0 %v41
  %672 = vmatpush.msra.mxu0 %v37
  %673 = vmatpush.msra.mxu0 %v33
  %674 = vmatmul.f32.gmra.mxu0 %v636
  %v675 = vpop.f32.mrf.mxu0
  %v676 = vadd.f32 0.0, %v675
  %677 = vdwg.mxu0
  %678 = vmatpush.msra.mxu0 %v94
  %679 = vmatpush.msra.mxu0 %v90
  %680 = vmatpush.msra.mxu0 %v86
  %681 = vmatpush.msra.mxu0 %v82
  %682 = vmatpush.msra.mxu0 %v78
  %683 = vmatpush.msra.mxu0 %v74
  %684 = vmatpush.msra.mxu0 %v70
  %685 = vmatpush.msra.mxu0 %v66
  %686 = vmatpush.msra.mxu0 %v62
  %687 = vmatpush.msra.mxu0 %v58
  %688 = vmatpush.msra.mxu0 %v54
  %689 = vmatpush.msra.mxu0 %v50
  %690 = vmatpush.msra.mxu0 %v46
  %691 = vmatpush.msra.mxu0 %v42
  %692 = vmatpush.msra.mxu0 %v38
  %693 = vmatpush.msra.mxu0 %v34
  %694 = vmatmul.f32.gmra.mxu0 %v636
  %v695 = vpop.f32.mrf.mxu0
  %v696 = vadd.f32 0.0, %v695
  %697 = vdwg.mxu0
  %698 = vmatpush.msra.mxu0 %v95
  %699 = vmatpush.msra.mxu0 %v91
  %700 = vmatpush.msra.mxu0 %v87
  %701 = vmatpush.msra.mxu0 %v83
  %702 = vmatpush.msra.mxu0 %v79
  %703 = vmatpush.msra.mxu0 %v75
  %704 = vmatpush.msra.mxu0 %v71
  %705 = vmatpush.msra.mxu0 %v67
  %706 = vmatpush.msra.mxu0 %v63
  %707 = vmatpush.msra.mxu0 %v59
  %708 = vmatpush.msra.mxu0 %v55
  %709 = vmatpush.msra.mxu0 %v51
  %710 = vmatpush.msra.mxu0 %v47
  %711 = vmatpush.msra.mxu0 %v43
  %712 = vmatpush.msra.mxu0 %v39
  %713 = vmatpush.msra.mxu0 %v35
  %714 = vmatmul.f32.gmra.mxu0 %v636
  %v715 = vpop.f32.mrf.mxu0
  %v716 = vadd.f32 0.0, %v715
  %717 = vdwg.mxu0
  %v718 = vadd.f32 %v202, %v656
  %v719 = vadd.f32 %v243, %v676
  %v720 = vadd.f32 %v284, %v696
  %v721 = vadd.f32 %v325, %v716
  %v722 = vxor.u32 %v718, 2147483648
  %v723 = vmul.f32 %v722, 1.442695
  %v724 = vpow.pop %v723
  %v725 = vadd.f32 %v724, 1.0
  %v726 = vrcp.pop %v725
  %v727 = vmul.f32 %v725, %v726
  %v728 = vsub.f32 1.0, %v727
  %v729 = vmul.f32 %v726, %v728
  %v730 = vadd.f32 %v726, %v729
  %vm731 = vweird.f32 %v725
  %vm732 = vweird.f32 %v726
  %vm733 = vmor %vm731, %vm732
  %v734 = vsel %vm733, %v726, %v730
  %v735 = vand.u32 2147483647, %v725
  %vm736 = vcmp.eq.f32.partialorder %v735, 8.507059e+37
  %v737 = vand.u32 %v725, 2147483648
  %v738 = vor.u32 1.1754944e-38, %v737
  %v739 = vsel %vm736, %v738, %v734
  %v740 = vmul.f32 1.0, %v739
  %v741 = vxor.u32 %v719, 2147483648
  %v742 = vmul.f32 %v741, 1.442695
  %v743 = vpow.pop %v742
  %v744 = vadd.f32 %v743, 1.0
  %v745 = vrcp.pop %v744
  %v746 = vmul.f32 %v744, %v745
  %v747 = vsub.f32 1.0, %v746
  %v748 = vmul.f32 %v745, %v747
  %v749 = vadd.f32 %v745, %v748
  %vm750 = vweird.f32 %v744
  %vm751 = vweird.f32 %v745
  %vm752 = vmor %vm750, %vm751
  %v753 = vsel %vm752, %v745, %v749
  %v754 = vand.u32 2147483647, %v744
  %vm755 = vcmp.eq.f32.partialorder %v754, 8.507059e+37
  %v756 = vand.u32 %v744, 2147483648
  %v757 = vor.u32 1.1754944e-38, %v756
  %v758 = vsel %vm755, %v757, %v753
  %v759 = vmul.f32 1.0, %v758
  %v760 = vtanh.pop %v720
  %v761 = vxor.u32 %v721, 2147483648
  %v762 = vmul.f32 %v761, 1.442695
  %v763 = vpow.pop %v762
  %v764 = vadd.f32 %v763, 1.0
  %v765 = vrcp.pop %v764
  %v766 = vmul.f32 %v764, %v765
  %v767 = vsub.f32 1.0, %v766
  %v768 = vmul.f32 %v765, %v767
  %v769 = vadd.f32 %v765, %v768
  %vm770 = vweird.f32 %v764
  %vm771 = vweird.f32 %v765
  %vm772 = vmor %vm770, %vm771
  %v773 = vsel %vm772, %v765, %v769
  %v774 = vand.u32 2147483647, %v764
  %vm775 = vcmp.eq.f32.partialorder %v774, 8.507059e+37
  %v776 = vand.u32 %v764, 2147483648
  %v777 = vor.u32 1.1754944e-38, %v776
  %v778 = vsel %vm775, %v777, %v773
  %v779 = vmul.f32 1.0, %v778
  %v780 = vmul.f32 %v759, %v634
  %v781 = vmul.f32 %v740, %v760
  %v782 = vadd.f32 %v780, %v781
  %v783 = vtanh.pop %v782
  %v784 = vmul.f32 %v779, %v783
  %v785 = vadd.f32 %v637, %v784
  %786 = vmatpush.msra.mxu0 %v92
  %787 = vmatpush.msra.mxu0 %v88
  %788 = vmatpush.msra.mxu0 %v84
  %789 = vmatpush.msra.mxu0 %v80
  %790 = vmatpush.msra.mxu0 %v76
  %791 = vmatpush.msra.mxu0 %v72
  %792 = vmatpush.msra.mxu0 %v68
  %793 = vmatpush.msra.mxu0 %v64
  %794 = vmatpush.msra.mxu0 %v60
  %795 = vmatpush.msra.mxu0 %v56
  %796 = vmatpush.msra.mxu0 %v52
  %797 = vmatpush.msra.mxu0 %v48
  %798 = vmatpush.msra.mxu0 %v44
  %799 = vmatpush.msra.mxu0 %v40
  %800 = vmatpush.msra.mxu0 %v36
  %801 = vmatpush.msra.mxu0 %v32
  %802 = vmatmul.f32.gmra.mxu0 %v784
  %v803 = vpop.f32.mrf.mxu0
  %v804 = vadd.f32 0.0, %v803
  %805 = vdwg.mxu0
  %806 = vmatpush.msra.mxu0 %v93
  %807 = vmatpush.msra.mxu0 %v89
  %808 = vmatpush.msra.mxu0 %v85
  %809 = vmatpush.msra.mxu0 %v81
  %810 = vmatpush.msra.mxu0 %v77
  %811 = vmatpush.msra.mxu0 %v73
  %812 = vmatpush.msra.mxu0 %v69
  %813 = vmatpush.msra.mxu0 %v65
  %814 = vmatpush.msra.mxu0 %v61
  %815 = vmatpush.msra.mxu0 %v57
  %816 = vmatpush.msra.mxu0 %v53
  %817 = vmatpush.msra.mxu0 %v49
  %818 = vmatpush.msra.mxu0 %v45
  %819 = vmatpush.msra.mxu0 %v41
  %820 = vmatpush.msra.mxu0 %v37
  %821 = vmatpush.msra.mxu0 %v33
  %822 = vmatmul.f32.gmra.mxu0 %v784
  %v823 = vpop.f32.mrf.mxu0
  %v824 = vadd.f32 0.0, %v823
  %825 = vdwg.mxu0
  %826 = vmatpush.msra.mxu0 %v94
  %827 = vmatpush.msra.mxu0 %v90
  %828 = vmatpush.msra.mxu0 %v86
  %829 = vmatpush.msra.mxu0 %v82
  %830 = vmatpush.msra.mxu0 %v78
  %831 = vmatpush.msra.mxu0 %v74
  %832 = vmatpush.msra.mxu0 %v70
  %833 = vmatpush.msra.mxu0 %v66
  %834 = vmatpush.msra.mxu0 %v62
  %835 = vmatpush.msra.mxu0 %v58
  %836 = vmatpush.msra.mxu0 %v54
  %837 = vmatpush.msra.mxu0 %v50
  %838 = vmatpush.msra.mxu0 %v46
  %839 = vmatpush.msra.mxu0 %v42
  %840 = vmatpush.msra.mxu0 %v38
  %841 = vmatpush.msra.mxu0 %v34
  %842 = vmatmul.f32.gmra.mxu0 %v784
  %v843 = vpop.f32.mrf.mxu0
  %v844 = vadd.f32 0.0, %v843
  %845 = vdwg.mxu0
  %846 = vmatpush.msra.mxu0 %v95
  %847 = vmatpush.msra.mxu0 %v91
  %848 = vmatpush.msra.mxu0 %v87
  %849 = vmatpush.msra.mxu0 %v83
  %850 = vmatpush.msra.mxu0 %v79
  %851 = vmatpush.msra.mxu0 %v75
  %852 = vmatpush.msra.mxu0 %v71
  %853 = vmatpush.msra.mxu0 %v67
  %854 = vmatpush.msra.mxu0 %v63
  %855 = vmatpush.msra.mxu0 %v59
  %856 = vmatpush.msra.mxu0 %v55
  %857 = vmatpush.msra.mxu0 %v51
  %858 = vmatpush.msra.mxu0 %v47
  %859 = vmatpush.msra.mxu0 %v43
  %860 = vmatpush.msra.mxu0 %v39
  %861 = vmatpush.msra.mxu0 %v35
  %862 = vmatmul.f32.gmra.mxu0 %v784
  %v863 = vpop.f32.mrf.mxu0
  %v864 = vadd.f32 0.0, %v863
  %865 = vdwg.mxu0
  %v866 = vadd.f32 %v205, %v804
  %v867 = vadd.f32 %v246, %v824
  %v868 = vadd.f32 %v287, %v844
  %v869 = vadd.f32 %v328, %v864
  %v870 = vxor.u32 %v866, 2147483648
  %v871 = vmul.f32 %v870, 1.442695
  %v872 = vpow.pop %v871
  %v873 = vadd.f32 %v872, 1.0
  %v874 = vrcp.pop %v873
  %v875 = vmul.f32 %v873, %v874
  %v876 = vsub.f32 1.0, %v875
  %v877 = vmul.f32 %v874, %v876
  %v878 = vadd.f32 %v874, %v877
  %vm879 = vweird.f32 %v873
  %vm880 = vweird.f32 %v874
  %vm881 = vmor %vm879, %vm880
  %v882 = vsel %vm881, %v874, %v878
  %v883 = vand.u32 2147483647, %v873
  %vm884 = vcmp.eq.f32.partialorder %v883, 8.507059e+37
  %v885 = vand.u32 %v873, 2147483648
  %v886 = vor.u32 1.1754944e-38, %v885
  %v887 = vsel %vm884, %v886, %v882
  %v888 = vmul.f32 1.0, %v887
  %v889 = vxor.u32 %v867, 2147483648
  %v890 = vmul.f32 %v889, 1.442695
  %v891 = vpow.pop %v890
  %v892 = vadd.f32 %v891, 1.0
  %v893 = vrcp.pop %v892
  %v894 = vmul.f32 %v892, %v893
  %v895 = vsub.f32 1.0, %v894
  %v896 = vmul.f32 %v893, %v895
  %v897 = vadd.f32 %v893, %v896
  %vm898 = vweird.f32 %v892
  %vm899 = vweird.f32 %v893
  %vm900 = vmor %vm898, %vm899
  %v901 = vsel %vm900, %v893, %v897
  %v902 = vand.u32 2147483647, %v892
  %vm903 = vcmp.eq.f32.partialorder %v902, 8.507059e+37
  %v904 = vand.u32 %v892, 2147483648
  %v905 = vor.u32 1.1754944e-38, %v904
  %v906 = vsel %vm903, %v905, %v901
  %v907 = vmul.f32 1.0, %v906
  %v908 = vtanh.pop %v868
  %v909 = vxor.u32 %v869, 2147483648
  %v910 = vmul.f32 %v909, 1.442695
  %v911 = vpow.pop %v910
  %v912 = vadd.f32 %v911, 1.0
  %v913 = vrcp.pop %v912
  %v914 = vmul.f32 %v912, %v913
  %v915 = vsub.f32 1.0, %v914
  %v916 = vmul.f32 %v913, %v915
  %v917 = vadd.f32 %v913, %v916
  %vm918 = vweird.f32 %v912
  %vm919 = vweird.f32 %v913
  %vm920 = vmor %vm918, %vm919
  %v921 = vsel %vm920, %v913, %v917
  %v922 = vand.u32 2147483647, %v912
  %vm923 = vcmp.eq.f32.partialorder %v922, 8.507059e+37
  %v924 = vand.u32 %v912, 2147483648
  %v925 = vor.u32 1.1754944e-38, %v924
  %v926 = vsel %vm923, %v925, %v921
  %v927 = vmul.f32 1.0, %v926
  %v928 = vmul.f32 %v907, %v782
  %v929 = vmul.f32 %v888, %v908
  %v930 = vadd.f32 %v928, %v929
  %v931 = vtanh.pop %v930
  %v932 = vmul.f32 %v927, %v931
  %v933 = vadd.f32 %v785, %v932
  %934 = vmatpush.msra.mxu0 %v92
  %935 = vmatpush.msra.mxu0 %v88
  %936 = vmatpush.msra.mxu0 %v84
  %937 = vmatpush.msra.mxu0 %v80
  %938 = vmatpush.msra.mxu0 %v76
  %939 = vmatpush.msra.mxu0 %v72
  %940 = vmatpush.msra.mxu0 %v68
  %941 = vmatpush.msra.mxu0 %v64
  %942 = vmatpush.msra.mxu0 %v60
  %943 = vmatpush.msra.mxu0 %v56
  %944 = vmatpush.msra.mxu0 %v52
  %945 = vmatpush.msra.mxu0 %v48
  %946 = vmatpush.msra.mxu0 %v44
  %947 = vmatpush.msra.mxu0 %v40
  %948 = vmatpush.msra.mxu0 %v36
  %949 = vmatpush.msra.mxu0 %v32
  %950 = vmatmul.f32.gmra.mxu0 %v932
  %v951 = vpop.f32.mrf.mxu0
  %v952 = vadd.f32 0.0, %v951
  %953 = vdwg.mxu0
  %954 = vmatpush.msra.mxu0 %v93
  %955 = vmatpush.msra.mxu0 %v89
  %956 = vmatpush.msra.mxu0 %v85
  %957 = vmatpush.msra.mxu0 %v81
  %958 = vmatpush.msra.mxu0 %v77
  %959 = vmatpush.msra.mxu0 %v73
  %960 = vmatpush.msra.mxu0 %v69
  %961 = vmatpush.msra.mxu0 %v65
  %962 = vmatpush.msra.mxu0 %v61
  %963 = vmatpush.msra.mxu0 %v57
  %964 = vmatpush.msra.mxu0 %v53
  %965 = vmatpush.msra.mxu0 %v49
  %966 = vmatpush.msra.mxu0 %v45
  %967 = vmatpush.msra.mxu0 %v41
  %968 = vmatpush.msra.mxu0 %v37
  %969 = vmatpush.msra.mxu0 %v33
  %970 = vmatmul.f32.gmra.mxu0 %v932
  %v971 = vpop.f32.mrf.mxu0
  %v972 = vadd.f32 0.0, %v971
  %973 = vdwg.mxu0
  %974 = vmatpush.msra.mxu0 %v94
  %975 = vmatpush.msra.mxu0 %v90
  %976 = vmatpush.msra.mxu0 %v86
  %977 = vmatpush.msra.mxu0 %v82
  %978 = vmatpush.msra.mxu0 %v78
  %979 = vmatpush.msra.mxu0 %v74
  %980 = vmatpush.msra.mxu0 %v70
  %981 = vmatpush.msra.mxu0 %v66
  %982 = vmatpush.msra.mxu0 %v62
  %983 = vmatpush.msra.mxu0 %v58
  %984 = vmatpush.msra.mxu0 %v54
  %985 = vmatpush.msra.mxu0 %v50
  %986 = vmatpush.msra.mxu0 %v46
  %987 = vmatpush.msra.mxu0 %v42
  %988 = vmatpush.msra.mxu0 %v38
  %989 = vmatpush.msra.mxu0 %v34
  %990 = vmatmul.f32.gmra.mxu0 %v932
  %v991 = vpop.f32.mrf.mxu0
  %v992 = vadd.f32 0.0, %v991
  %993 = vdwg.mxu0
  %994 = vmatpush.msra.mxu0 %v95
  %995 = vmatpush.msra.mxu0 %v91
  %996 = vmatpush.msra.mxu0 %v87
  %997 = vmatpush.msra.mxu0 %v83
  %998 = vmatpush.msra.mxu0 %v79
  %999 = vmatpush.msra.mxu0 %v75
  %1000 = vmatpush.msra.mxu0 %v71
  %1001 = vmatpush.msra.mxu0 %v67
  %1002 = vmatpush.msra.mxu0 %v63
  %1003 = vmatpush.msra.mxu0 %v59
  %1004 = vmatpush.msra.mxu0 %v55
  %1005 = vmatpush.msra.mxu0 %v51
  %1006 = vmatpush.msra.mxu0 %v47
  %1007 = vmatpush.msra.mxu0 %v43
  %1008 = vmatpush.msra.mxu0 %v39
  %1009 = vmatpush.msra.mxu0 %v35
  %1010 = vmatmul.f32.gmra.mxu0 %v932
  %v1011 = vpop.f32.mrf.mxu0
  %v1012 = vadd.f32 0.0, %v1011
  %1013 = vdwg.mxu0
  %v1014 = vadd.f32 %v208, %v952
  %v1015 = vadd.f32 %v249, %v972
  %v1016 = vadd.f32 %v290, %v992
  %v1017 = vadd.f32 %v331, %v1012
  %v1018 = vxor.u32 %v1014, 2147483648
  %v1019 = vmul.f32 %v1018, 1.442695
  %v1020 = vpow.pop %v1019
  %v1021 = vadd.f32 %v1020, 1.0
  %v1022 = vrcp.pop %v1021
  %v1023 = vmul.f32 %v1021, %v1022
  %v1024 = vsub.f32 1.0, %v1023
  %v1025 = vmul.f32 %v1022, %v1024
  %v1026 = vadd.f32 %v1022, %v1025
  %vm1027 = vweird.f32 %v1021
  %vm1028 = vweird.f32 %v1022
  %vm1029 = vmor %vm1027, %vm1028
  %v1030 = vsel %vm1029, %v1022, %v1026
  %v1031 = vand.u32 2147483647, %v1021
  %vm1032 = vcmp.eq.f32.partialorder %v1031, 8.507059e+37
  %v1033 = vand.u32 %v1021, 2147483648
  %v1034 = vor.u32 1.1754944e-38, %v1033
  %v1035 = vsel %vm1032, %v1034, %v1030
  %v1036 = vmul.f32 1.0, %v1035
  %v1037 = vxor.u32 %v1015, 2147483648
  %v1038 = vmul.f32 %v1037, 1.442695
  %v1039 = vpow.pop %v1038
  %v1040 = vadd.f32 %v1039, 1.0
  %v1041 = vrcp.pop %v1040
  %v1042 = vmul.f32 %v1040, %v1041
  %v1043 = vsub.f32 1.0, %v1042
  %v1044 = vmul.f32 %v1041, %v1043
  %v1045 = vadd.f32 %v1041, %v1044
  %vm1046 = vweird.f32 %v1040
  %vm1047 = vweird.f32 %v1041
  %vm1048 = vmor %vm1046, %vm1047
  %v1049 = vsel %vm1048, %v1041, %v1045
  %v1050 = vand.u32 2147483647, %v1040
  %vm1051 = vcmp.eq.f32.partialorder %v1050, 8.507059e+37
  %v1052 = vand.u32 %v1040, 2147483648
  %v1053 = vor.u32 1.1754944e-38, %v1052
  %v1054 = vsel %vm1051, %v1053, %v1049
  %v1055 = vmul.f32 1.0, %v1054
  %v1056 = vtanh.pop %v1016
  %v1057 = vxor.u32 %v1017, 2147483648
  %v1058 = vmul.f32 %v1057, 1.442695
  %v1059 = vpow.pop %v1058
  %v1060 = vadd.f32 %v1059, 1.0
  %v1061 = vrcp.pop %v1060
  %v1062 = vmul.f32 %v1060, %v1061
  %v1063 = vsub.f32 1.0, %v1062
  %v1064 = vmul.f32 %v1061, %v1063
  %v1065 = vadd.f32 %v1061, %v1064
  %vm1066 = vweird.f32 %v1060
  %vm1067 = vweird.f32 %v1061
  %vm1068 = vmor %vm1066, %vm1067
  %v1069 = vsel %vm1068, %v1061, %v1065
  %v1070 = vand.u32 2147483647, %v1060
  %vm1071 = vcmp.eq.f32.partialorder %v1070, 8.507059e+37
  %v1072 = vand.u32 %v1060, 2147483648
  %v1073 = vor.u32 1.1754944e-38, %v1072
  %v1074 = vsel %vm1071, %v1073, %v1069
  %v1075 = vmul.f32 1.0, %v1074
  %v1076 = vmul.f32 %v1055, %v930
  %v1077 = vmul.f32 %v1036, %v1056
  %v1078 = vadd.f32 %v1076, %v1077
  %v1079 = vtanh.pop %v1078
  %v1080 = vmul.f32 %v1075, %v1079
  %v1081 = vadd.f32 %v933, %v1080
  %1082 = vmatpush.msra.mxu0 %v92
  %1083 = vmatpush.msra.mxu0 %v88
  %1084 = vmatpush.msra.mxu0 %v84
  %1085 = vmatpush.msra.mxu0 %v80
  %1086 = vmatpush.msra.mxu0 %v76
  %1087 = vmatpush.msra.mxu0 %v72
  %1088 = vmatpush.msra.mxu0 %v68
  %1089 = vmatpush.msra.mxu0 %v64
  %1090 = vmatpush.msra.mxu0 %v60
  %1091 = vmatpush.msra.mxu0 %v56
  %1092 = vmatpush.msra.mxu0 %v52
  %1093 = vmatpush.msra.mxu0 %v48
  %1094 = vmatpush.msra.mxu0 %v44
  %1095 = vmatpush.msra.mxu0 %v40
  %1096 = vmatpush.msra.mxu0 %v36
  %1097 = vmatpush.msra.mxu0 %v32
  %1098 = vmatmul.f32.gmra.mxu0 %v1080
  %v1099 = vpop.f32.mrf.mxu0
  %v1100 = vadd.f32 0.0, %v1099
  %1101 = vdwg.mxu0
  %1102 = vmatpush.msra.mxu0 %v93
  %1103 = vmatpush.msra.mxu0 %v89
  %1104 = vmatpush.msra.mxu0 %v85
  %1105 = vmatpush.msra.mxu0 %v81
  %1106 = vmatpush.msra.mxu0 %v77
  %1107 = vmatpush.msra.mxu0 %v73
  %1108 = vmatpush.msra.mxu0 %v69
  %1109 = vmatpush.msra.mxu0 %v65
  %1110 = vmatpush.msra.mxu0 %v61
  %1111 = vmatpush.msra.mxu0 %v57
  %1112 = vmatpush.msra.mxu0 %v53
  %1113 = vmatpush.msra.mxu0 %v49
  %1114 = vmatpush.msra.mxu0 %v45
  %1115 = vmatpush.msra.mxu0 %v41
  %1116 = vmatpush.msra.mxu0 %v37
  %1117 = vmatpush.msra.mxu0 %v33
  %1118 = vmatmul.f32.gmra.mxu0 %v1080
  %v1119 = vpop.f32.mrf.mxu0
  %v1120 = vadd.f32 0.0, %v1119
  %1121 = vdwg.mxu0
  %1122 = vmatpush.msra.mxu0 %v94
  %1123 = vmatpush.msra.mxu0 %v90
  %1124 = vmatpush.msra.mxu0 %v86
  %1125 = vmatpush.msra.mxu0 %v82
  %1126 = vmatpush.msra.mxu0 %v78
  %1127 = vmatpush.msra.mxu0 %v74
  %1128 = vmatpush.msra.mxu0 %v70
  %1129 = vmatpush.msra.mxu0 %v66
  %1130 = vmatpush.msra.mxu0 %v62
  %1131 = vmatpush.msra.mxu0 %v58
  %1132 = vmatpush.msra.mxu0 %v54
  %1133 = vmatpush.msra.mxu0 %v50
  %1134 = vmatpush.msra.mxu0 %v46
  %1135 = vmatpush.msra.mxu0 %v42
  %1136 = vmatpush.msra.mxu0 %v38
  %1137 = vmatpush.msra.mxu0 %v34
  %1138 = vmatmul.f32.gmra.mxu0 %v1080
  %v1139 = vpop.f32.mrf.mxu0
  %v1140 = vadd.f32 0.0, %v1139
  %1141 = vdwg.mxu0
  %1142 = vmatpush.msra.mxu0 %v95
  %1143 = vmatpush.msra.mxu0 %v91
  %1144 = vmatpush.msra.mxu0 %v87
  %1145 = vmatpush.msra.mxu0 %v83
  %1146 = vmatpush.msra.mxu0 %v79
  %1147 = vmatpush.msra.mxu0 %v75
  %1148 = vmatpush.msra.mxu0 %v71
  %1149 = vmatpush.msra.mxu0 %v67
  %1150 = vmatpush.msra.mxu0 %v63
  %1151 = vmatpush.msra.mxu0 %v59
  %1152 = vmatpush.msra.mxu0 %v55
  %1153 = vmatpush.msra.mxu0 %v51
  %1154 = vmatpush.msra.mxu0 %v47
  %1155 = vmatpush.msra.mxu0 %v43
  %1156 = vmatpush.msra.mxu0 %v39
  %1157 = vmatpush.msra.mxu0 %v35
  %1158 = vmatmul.f32.gmra.mxu0 %v1080
  %v1159 = vpop.f32.mrf.mxu0
  %v1160 = vadd.f32 0.0, %v1159
  %1161 = vdwg.mxu0
  %v1162 = vadd.f32 %v211, %v1100
  %v1163 = vadd.f32 %v252, %v1120
  %v1164 = vadd.f32 %v293, %v1140
  %v1165 = vadd.f32 %v334, %v1160
  %v1166 = vxor.u32 %v1162, 2147483648
  %v1167 = vmul.f32 %v1166, 1.442695
  %v1168 = vpow.pop %v1167
  %v1169 = vadd.f32 %v1168, 1.0
  %v1170 = vrcp.pop %v1169
  %v1171 = vmul.f32 %v1169, %v1170
  %v1172 = vsub.f32 1.0, %v1171
  %v1173 = vmul.f32 %v1170, %v1172
  %v1174 = vadd.f32 %v1170, %v1173
  %vm1175 = vweird.f32 %v1169
  %vm1176 = vweird.f32 %v1170
  %vm1177 = vmor %vm1175, %vm1176
  %v1178 = vsel %vm1177, %v1170, %v1174
  %v1179 = vand.u32 2147483647, %v1169
  %vm1180 = vcmp.eq.f32.partialorder %v1179, 8.507059e+37
  %v1181 = vand.u32 %v1169, 2147483648
  %v1182 = vor.u32 1.1754944e-38, %v1181
  %v1183 = vsel %vm1180, %v1182, %v1178
  %v1184 = vmul.f32 1.0, %v1183
  %v1185 = vxor.u32 %v1163, 2147483648
  %v1186 = vmul.f32 %v1185, 1.442695
  %v1187 = vpow.pop %v1186
  %v1188 = vadd.f32 %v1187, 1.0
  %v1189 = vrcp.pop %v1188
  %v1190 = vmul.f32 %v1188, %v1189
  %v1191 = vsub.f32 1.0, %v1190
  %v1192 = vmul.f32 %v1189, %v1191
  %v1193 = vadd.f32 %v1189, %v1192
  %vm1194 = vweird.f32 %v1188
  %vm1195 = vweird.f32 %v1189
  %vm1196 = vmor %vm1194, %vm1195
  %v1197 = vsel %vm1196, %v1189, %v1193
  %v1198 = vand.u32 2147483647, %v1188
  %vm1199 = vcmp.eq.f32.partialorder %v1198, 8.507059e+37
  %v1200 = vand.u32 %v1188, 2147483648
  %v1201 = vor.u32 1.1754944e-38, %v1200
  %v1202 = vsel %vm1199, %v1201, %v1197
  %v1203 = vmul.f32 1.0, %v1202
  %v1204 = vtanh.pop %v1164
  %v1205 = vxor.u32 %v1165, 2147483648
  %v1206 = vmul.f32 %v1205, 1.442695
  %v1207 = vpow.pop %v1206
  %v1208 = vadd.f32 %v1207, 1.0
  %v1209 = vrcp.pop %v1208
  %v1210 = vmul.f32 %v1208, %v1209
  %v1211 = vsub.f32 1.0, %v1210
  %v1212 = vmul.f32 %v1209, %v1211
  %v1213 = vadd.f32 %v1209, %v1212
  %vm1214 = vweird.f32 %v1208
  %vm1215 = vweird.f32 %v1209
  %vm1216 = vmor %vm1214, %vm1215
  %v1217 = vsel %vm1216, %v1209, %v1213
  %v1218 = vand.u32 2147483647, %v1208
  %vm1219 = vcmp.eq.f32.partialorder %v1218, 8.507059e+37
  %v1220 = vand.u32 %v1208, 2147483648
  %v1221 = vor.u32 1.1754944e-38, %v1220
  %v1222 = vsel %vm1219, %v1221, %v1217
  %v1223 = vmul.f32 1.0, %v1222
  %v1224 = vmul.f32 %v1203, %v1078
  %v1225 = vmul.f32 %v1184, %v1204
  %v1226 = vadd.f32 %v1224, %v1225
  %v1227 = vtanh.pop %v1226
  %v1228 = vmul.f32 %v1223, %v1227
  %v1229 = vadd.f32 %v1081, %v1228
  %1230 = vmatpush.msra.mxu0 %v92
  %1231 = vmatpush.msra.mxu0 %v88
  %1232 = vmatpush.msra.mxu0 %v84
  %1233 = vmatpush.msra.mxu0 %v80
  %1234 = vmatpush.msra.mxu0 %v76
  %1235 = vmatpush.msra.mxu0 %v72
  %1236 = vmatpush.msra.mxu0 %v68
  %1237 = vmatpush.msra.mxu0 %v64
  %1238 = vmatpush.msra.mxu0 %v60
  %1239 = vmatpush.msra.mxu0 %v56
  %1240 = vmatpush.msra.mxu0 %v52
  %1241 = vmatpush.msra.mxu0 %v48
  %1242 = vmatpush.msra.mxu0 %v44
  %1243 = vmatpush.msra.mxu0 %v40
  %1244 = vmatpush.msra.mxu0 %v36
  %1245 = vmatpush.msra.mxu0 %v32
  %1246 = vmatmul.f32.gmra.mxu0 %v1228
  %v1247 = vpop.f32.mrf.mxu0
  %v1248 = vadd.f32 0.0, %v1247
  %1249 = vdwg.mxu0
  %1250 = vmatpush.msra.mxu0 %v93
  %1251 = vmatpush.msra.mxu0 %v89
  %1252 = vmatpush.msra.mxu0 %v85
  %1253 = vmatpush.msra.mxu0 %v81
  %1254 = vmatpush.msra.mxu0 %v77
  %1255 = vmatpush.msra.mxu0 %v73
  %1256 = vmatpush.msra.mxu0 %v69
  %1257 = vmatpush.msra.mxu0 %v65
  %1258 = vmatpush.msra.mxu0 %v61
  %1259 = vmatpush.msra.mxu0 %v57
  %1260 = vmatpush.msra.mxu0 %v53
  %1261 = vmatpush.msra.mxu0 %v49
  %1262 = vmatpush.msra.mxu0 %v45
  %1263 = vmatpush.msra.mxu0 %v41
  %1264 = vmatpush.msra.mxu0 %v37
  %1265 = vmatpush.msra.mxu0 %v33
  %1266 = vmatmul.f32.gmra.mxu0 %v1228
  %v1267 = vpop.f32.mrf.mxu0
  %v1268 = vadd.f32 0.0, %v1267
  %1269 = vdwg.mxu0
  %1270 = vmatpush.msra.mxu0 %v94
  %1271 = vmatpush.msra.mxu0 %v90
  %1272 = vmatpush.msra.mxu0 %v86
  %1273 = vmatpush.msra.mxu0 %v82
  %1274 = vmatpush.msra.mxu0 %v78
  %1275 = vmatpush.msra.mxu0 %v74
  %1276 = vmatpush.msra.mxu0 %v70
  %1277 = vmatpush.msra.mxu0 %v66
  %1278 = vmatpush.msra.mxu0 %v62
  %1279 = vmatpush.msra.mxu0 %v58
  %1280 = vmatpush.msra.mxu0 %v54
  %1281 = vmatpush.msra.mxu0 %v50
  %1282 = vmatpush.msra.mxu0 %v46
  %1283 = vmatpush.msra.mxu0 %v42
  %1284 = vmatpush.msra.mxu0 %v38
  %1285 = vmatpush.msra.mxu0 %v34
  %1286 = vmatmul.f32.gmra.mxu0 %v1228
  %v1287 = vpop.f32.mrf.mxu0
  %v1288 = vadd.f32 0.0, %v1287
  %1289 = vdwg.mxu0
  %1290 = vmatpush.msra.mxu0 %v95
  %1291 = vmatpush.msra.mxu0 %v91
  %1292 = vmatpush.msra.mxu0 %v87
  %1293 = vmatpush.msra.mxu0 %v83
  %1294 = vmatpush.msra.mxu0 %v79
  %1295 = vmatpush.msra.mxu0 %v75
  %1296 = vmatpush.msra.mxu0 %v71
  %1297 = vmatpush.msra.mxu0 %v67
  %1298 = vmatpush.msra.mxu0 %v63
  %1299 = vmatpush.msra.mxu0 %v59
  %1300 = vmatpush.msra.mxu0 %v55
  %1301 = vmatpush.msra.mxu0 %v51
  %1302 = vmatpush.msra.mxu0 %v47
  %1303 = vmatpush.msra.mxu0 %v43
  %1304 = vmatpush.msra.mxu0 %v39
  %1305 = vmatpush.msra.mxu0 %v35
  %1306 = vmatmul.f32.gmra.mxu0 %v1228
  %v1307 = vpop.f32.mrf.mxu0
  %v1308 = vadd.f32 0.0, %v1307
  %1309 = vdwg.mxu0
  %v1310 = vadd.f32 %v214, %v1248
  %v1311 = vadd.f32 %v255, %v1268
  %v1312 = vadd.f32 %v296, %v1288
  %v1313 = vadd.f32 %v337, %v1308
  %v1314 = vxor.u32 %v1310, 2147483648
  %v1315 = vmul.f32 %v1314, 1.442695
  %v1316 = vpow.pop %v1315
  %v1317 = vadd.f32 %v1316, 1.0
  %v1318 = vrcp.pop %v1317
  %v1319 = vmul.f32 %v1317, %v1318
  %v1320 = vsub.f32 1.0, %v1319
  %v1321 = vmul.f32 %v1318, %v1320
  %v1322 = vadd.f32 %v1318, %v1321
  %vm1323 = vweird.f32 %v1317
  %vm1324 = vweird.f32 %v1318
  %vm1325 = vmor %vm1323, %vm1324
  %v1326 = vsel %vm1325, %v1318, %v1322
  %v1327 = vand.u32 2147483647, %v1317
  %vm1328 = vcmp.eq.f32.partialorder %v1327, 8.507059e+37
  %v1329 = vand.u32 %v1317, 2147483648
  %v1330 = vor.u32 1.1754944e-38, %v1329
  %v1331 = vsel %vm1328, %v1330, %v1326
  %v1332 = vmul.f32 1.0, %v1331
  %v1333 = vxor.u32 %v1311, 2147483648
  %v1334 = vmul.f32 %v1333, 1.442695
  %v1335 = vpow.pop %v1334
  %v1336 = vadd.f32 %v1335, 1.0
  %v1337 = vrcp.pop %v1336
  %v1338 = vmul.f32 %v1336, %v1337
  %v1339 = vsub.f32 1.0, %v1338
  %v1340 = vmul.f32 %v1337, %v1339
  %v1341 = vadd.f32 %v1337, %v1340
  %vm1342 = vweird.f32 %v1336
  %vm1343 = vweird.f32 %v1337
  %vm1344 = vmor %vm1342, %vm1343
  %v1345 = vsel %vm1344, %v1337, %v1341
  %v1346 = vand.u32 2147483647, %v1336
  %vm1347 = vcmp.eq.f32.partialorder %v1346, 8.507059e+37
  %v1348 = vand.u32 %v1336, 2147483648
  %v1349 = vor.u32 1.1754944e-38, %v1348
  %v1350 = vsel %vm1347, %v1349, %v1345
  %v1351 = vmul.f32 1.0, %v1350
  %v1352 = vtanh.pop %v1312
  %v1353 = vxor.u32 %v1313, 2147483648
  %v1354 = vmul.f32 %v1353, 1.442695
  %v1355 = vpow.pop %v1354
  %v1356 = vadd.f32 %v1355, 1.0
  %v1357 = vrcp.pop %v1356
  %v1358 = vmul.f32 %v1356, %v1357
  %v1359 = vsub.f32 1.0, %v1358
  %v1360 = vmul.f32 %v1357, %v1359
  %v1361 = vadd.f32 %v1357, %v1360
  %vm1362 = vweird.f32 %v1356
  %vm1363 = vweird.f32 %v1357
  %vm1364 = vmor %vm1362, %vm1363
  %v1365 = vsel %vm1364, %v1357, %v1361
  %v1366 = vand.u32 2147483647, %v1356
  %vm1367 = vcmp.eq.f32.partialorder %v1366, 8.507059e+37
  %v1368 = vand.u32 %v1356, 2147483648
  %v1369 = vor.u32 1.1754944e-38, %v1368
  %v1370 = vsel %vm1367, %v1369, %v1365
  %v1371 = vmul.f32 1.0, %v1370
  %v1372 = vmul.f32 %v1351, %v1226
  %v1373 = vmul.f32 %v1332, %v1352
  %v1374 = vadd.f32 %v1372, %v1373
  %v1375 = vtanh.pop %v1374
  %v1376 = vmul.f32 %v1371, %v1375
  %v1377 = vadd.f32 %v1229, %v1376
  %1378 = vmatpush.msra.mxu0 %v92
  %1379 = vmatpush.msra.mxu0 %v88
  %1380 = vmatpush.msra.mxu0 %v84
  %1381 = vmatpush.msra.mxu0 %v80
  %1382 = vmatpush.msra.mxu0 %v76
  %1383 = vmatpush.msra.mxu0 %v72
  %1384 = vmatpush.msra.mxu0 %v68
  %1385 = vmatpush.msra.mxu0 %v64
  %1386 = vmatpush.msra.mxu0 %v60
  %1387 = vmatpush.msra.mxu0 %v56
  %1388 = vmatpush.msra.mxu0 %v52
  %1389 = vmatpush.msra.mxu0 %v48
  %1390 = vmatpush.msra.mxu0 %v44
  %1391 = vmatpush.msra.mxu0 %v40
  %1392 = vmatpush.msra.mxu0 %v36
  %1393 = vmatpush.msra.mxu0 %v32
  %1394 = vmatmul.f32.gmra.mxu0 %v1376
  %v1395 = vpop.f32.mrf.mxu0
  %v1396 = vadd.f32 0.0, %v1395
  %1397 = vdwg.mxu0
  %1398 = vmatpush.msra.mxu0 %v93
  %1399 = vmatpush.msra.mxu0 %v89
  %1400 = vmatpush.msra.mxu0 %v85
  %1401 = vmatpush.msra.mxu0 %v81
  %1402 = vmatpush.msra.mxu0 %v77
  %1403 = vmatpush.msra.mxu0 %v73
  %1404 = vmatpush.msra.mxu0 %v69
  %1405 = vmatpush.msra.mxu0 %v65
  %1406 = vmatpush.msra.mxu0 %v61
  %1407 = vmatpush.msra.mxu0 %v57
  %1408 = vmatpush.msra.mxu0 %v53
  %1409 = vmatpush.msra.mxu0 %v49
  %1410 = vmatpush.msra.mxu0 %v45
  %1411 = vmatpush.msra.mxu0 %v41
  %1412 = vmatpush.msra.mxu0 %v37
  %1413 = vmatpush.msra.mxu0 %v33
  %1414 = vmatmul.f32.gmra.mxu0 %v1376
  %v1415 = vpop.f32.mrf.mxu0
  %v1416 = vadd.f32 0.0, %v1415
  %1417 = vdwg.mxu0
  %1418 = vmatpush.msra.mxu0 %v94
  %1419 = vmatpush.msra.mxu0 %v90
  %1420 = vmatpush.msra.mxu0 %v86
  %1421 = vmatpush.msra.mxu0 %v82
  %1422 = vmatpush.msra.mxu0 %v78
  %1423 = vmatpush.msra.mxu0 %v74
  %1424 = vmatpush.msra.mxu0 %v70
  %1425 = vmatpush.msra.mxu0 %v66
  %1426 = vmatpush.msra.mxu0 %v62
  %1427 = vmatpush.msra.mxu0 %v58
  %1428 = vmatpush.msra.mxu0 %v54
  %1429 = vmatpush.msra.mxu0 %v50
  %1430 = vmatpush.msra.mxu0 %v46
  %1431 = vmatpush.msra.mxu0 %v42
  %1432 = vmatpush.msra.mxu0 %v38
  %1433 = vmatpush.msra.mxu0 %v34
  %1434 = vmatmul.f32.gmra.mxu0 %v1376
  %v1435 = vpop.f32.mrf.mxu0
  %v1436 = vadd.f32 0.0, %v1435
  %1437 = vdwg.mxu0
  %1438 = vmatpush.msra.mxu0 %v95
  %1439 = vmatpush.msra.mxu0 %v91
  %1440 = vmatpush.msra.mxu0 %v87
  %1441 = vmatpush.msra.mxu0 %v83
  %1442 = vmatpush.msra.mxu0 %v79
  %1443 = vmatpush.msra.mxu0 %v75
  %1444 = vmatpush.msra.mxu0 %v71
  %1445 = vmatpush.msra.mxu0 %v67
  %1446 = vmatpush.msra.mxu0 %v63
  %1447 = vmatpush.msra.mxu0 %v59
  %1448 = vmatpush.msra.mxu0 %v55
  %1449 = vmatpush.msra.mxu0 %v51
  %1450 = vmatpush.msra.mxu0 %v47
  %1451 = vmatpush.msra.mxu0 %v43
  %1452 = vmatpush.msra.mxu0 %v39
  %1453 = vmatpush.msra.mxu0 %v35
  %1454 = vmatmul.f32.gmra.mxu0 %v1376
  %v1455 = vpop.f32.mrf.mxu0
  %v1456 = vadd.f32 0.0, %v1455
  %1457 = vdwg.mxu0
  %v1458 = vadd.f32 %v217, %v1396
  %v1459 = vadd.f32 %v258, %v1416
  %v1460 = vadd.f32 %v299, %v1436
  %v1461 = vadd.f32 %v340, %v1456
  %v1462 = vxor.u32 %v1458, 2147483648
  %v1463 = vmul.f32 %v1462, 1.442695
  %v1464 = vpow.pop %v1463
  %v1465 = vadd.f32 %v1464, 1.0
  %v1466 = vrcp.pop %v1465
  %v1467 = vmul.f32 %v1465, %v1466
  %v1468 = vsub.f32 1.0, %v1467
  %v1469 = vmul.f32 %v1466, %v1468
  %v1470 = vadd.f32 %v1466, %v1469
  %vm1471 = vweird.f32 %v1465
  %vm1472 = vweird.f32 %v1466
  %vm1473 = vmor %vm1471, %vm1472
  %v1474 = vsel %vm1473, %v1466, %v1470
  %v1475 = vand.u32 2147483647, %v1465
  %vm1476 = vcmp.eq.f32.partialorder %v1475, 8.507059e+37
  %v1477 = vand.u32 %v1465, 2147483648
  %v1478 = vor.u32 1.1754944e-38, %v1477
  %v1479 = vsel %vm1476, %v1478, %v1474
  %v1480 = vmul.f32 1.0, %v1479
  %v1481 = vxor.u32 %v1459, 2147483648
  %v1482 = vmul.f32 %v1481, 1.442695
  %v1483 = vpow.pop %v1482
  %v1484 = vadd.f32 %v1483, 1.0
  %v1485 = vrcp.pop %v1484
  %v1486 = vmul.f32 %v1484, %v1485
  %v1487 = vsub.f32 1.0, %v1486
  %v1488 = vmul.f32 %v1485, %v1487
  %v1489 = vadd.f32 %v1485, %v1488
  %vm1490 = vweird.f32 %v1484
  %vm1491 = vweird.f32 %v1485
  %vm1492 = vmor %vm1490, %vm1491
  %v1493 = vsel %vm1492, %v1485, %v1489
  %v1494 = vand.u32 2147483647, %v1484
  %vm1495 = vcmp.eq.f32.partialorder %v1494, 8.507059e+37
  %v1496 = vand.u32 %v1484, 2147483648
  %v1497 = vor.u32 1.1754944e-38, %v1496
  %v1498 = vsel %vm1495, %v1497, %v1493
  %v1499 = vmul.f32 1.0, %v1498
  %v1500 = vtanh.pop %v1460
  %v1501 = vxor.u32 %v1461, 2147483648
  %v1502 = vmul.f32 %v1501, 1.442695
  %v1503 = vpow.pop %v1502
  %v1504 = vadd.f32 %v1503, 1.0
  %v1505 = vrcp.pop %v1504
  %v1506 = vmul.f32 %v1504, %v1505
  %v1507 = vsub.f32 1.0, %v1506
  %v1508 = vmul.f32 %v1505, %v1507
  %v1509 = vadd.f32 %v1505, %v1508
  %vm1510 = vweird.f32 %v1504
  %vm1511 = vweird.f32 %v1505
  %vm1512 = vmor %vm1510, %vm1511
  %v1513 = vsel %vm1512, %v1505, %v1509
  %v1514 = vand.u32 2147483647, %v1504
  %vm1515 = vcmp.eq.f32.partialorder %v1514, 8.507059e+37
  %v1516 = vand.u32 %v1504, 2147483648
  %v1517 = vor.u32 1.1754944e-38, %v1516
  %v1518 = vsel %vm1515, %v1517, %v1513
  %v1519 = vmul.f32 1.0, %v1518
  %v1520 = vmul.f32 %v1499, %v1374
  %v1521 = vmul.f32 %v1480, %v1500
  %v1522 = vadd.f32 %v1520, %v1521
  %v1523 = vtanh.pop %v1522
  %v1524 = vmul.f32 %v1519, %v1523
  %v1525 = vadd.f32 %v1377, %v1524
  %v1526 = vld [vmem:[%s1] sm:$0xff]
  %v1527 = vld [vmem:[%s1 + $0x8] sm:$0xff]
  %v1528 = vld [vmem:[%s1 + $0x10] sm:$0xff]
  %v1529 = vld [vmem:[%s1 + $0x18] sm:$0xff]
  %v1530 = vld [vmem:[%s1 + $0x20] sm:$0xff]
  %v1531 = vld [vmem:[%s1 + $0x28] sm:$0xff]
  %v1532 = vld [vmem:[%s1 + $0x30] sm:$0xff]
  %v1533 = vld [vmem:[%s1 + $0x38] sm:$0xff]
  %v1534 = vld [vmem:[%s1 + $0x40] sm:$0xff]
  %v1535 = vld [vmem:[%s1 + $0x48] sm:$0xff]
  %v1536 = vld [vmem:[%s1 + $0x50] sm:$0xff]
  %v1537 = vld [vmem:[%s1 + $0x58] sm:$0xff]
  %v1538 = vld [vmem:[%s1 + $0x60] sm:$0xff]
  %v1539 = vld [vmem:[%s1 + $0x68] sm:$0xff]
  %v1540 = vld [vmem:[%s1 + $0x70] sm:$0xff]
  %v1541 = vld [vmem:[%s1 + $0x78] sm:$0xff]
  %v1542 = vld [vmem:[%s1 + $0x80] sm:$0xff]
  %v1543 = vld [vmem:[%s1 + $0x88] sm:$0xff]
  %v1544 = vld [vmem:[%s1 + $0x90] sm:$0xff]
  %v1545 = vld [vmem:[%s1 + $0x98] sm:$0xff]
  %v1546 = vld [vmem:[%s1 + $0xa0] sm:$0xff]
  %v1547 = vld [vmem:[%s1 + $0xa8] sm:$0xff]
  %v1548 = vld [vmem:[%s1 + $0xb0] sm:$0xff]
  %v1549 = vld [vmem:[%s1 + $0xb8] sm:$0xff]
  %v1550 = vld [vmem:[%s1 + $0xc0] sm:$0x1]
  %v1551 = vld [vmem:[%s1 + $0xc8] sm:$0x1]
  %v1552 = vld [vmem:[%s1 + $0xd0] sm:$0x1]
  %v1553 = vld [vmem:[%s1 + $0xd8] sm:$0x1]
  %v1554 = vld [vmem:[%s1 + $0xe0] sm:$0xff]
  %v1555 = vld [vmem:[%s1 + $0xe8] sm:$0xff]
  %v1556 = vld [vmem:[%s1 + $0xf0] sm:$0xff]
  %v1557 = vld [vmem:[%s1 + $0xf8] sm:$0xff]
  %v1558 = vld [vmem:[%s1 + $0x100] sm:$0xff]
  %v1559 = vld [vmem:[%s1 + $0x108] sm:$0xff]
  %v1560 = vld [vmem:[%s1 + $0x110] sm:$0xff]
  %v1561 = vld [vmem:[%s1 + $0x118] sm:$0xff]
  %v1562 = vld [vmem:[%s1 + $0x120] sm:$0xff]
  %v1563 = vld [vmem:[%s1 + $0x128] sm:$0xff]
  %v1564 = vld [vmem:[%s1 + $0x130] sm:$0xff]
  %v1565 = vld [vmem:[%s1 + $0x138] sm:$0xff]
  %v1566 = vld [vmem:[%s1 + $0x140] sm:$0xff]
  %v1567 = vld [vmem:[%s1 + $0x148] sm:$0xff]
  %v1568 = vld [vmem:[%s1 + $0x150] sm:$0xff]
  %v1569 = vld [vmem:[%s1 + $0x158] sm:$0xff]
  %v1570 = vld [vmem:[%s1 + $0x160] sm:$0xff]
  %v1571 = vld [vmem:[%s1 + $0x168] sm:$0xff]
  %v1572 = vld [vmem:[%s1 + $0x170] sm:$0xff]
  %v1573 = vld [vmem:[%s1 + $0x178] sm:$0xff]
  %v1574 = vld [vmem:[%s1 + $0x180] sm:$0xff]
  %v1575 = vld [vmem:[%s1 + $0x188] sm:$0xff]
  %v1576 = vld [vmem:[%s1 + $0x190] sm:$0xff]
  %v1577 = vld [vmem:[%s1 + $0x198] sm:$0xff]
  %v1578 = vld [vmem:[%s1 + $0x1a0] sm:$0x1]
  %v1579 = vld [vmem:[%s1 + $0x1a8] sm:$0x1]
  %v1580 = vld [vmem:[%s1 + $0x1b0] sm:$0x1]
  %v1581 = vld [vmem:[%s1 + $0x1b8] sm:$0x1]
  %v1582 = vld [vmem:[%s1 + $0x1c0] sm:$0xff]
  %v1583 = vld [vmem:[%s1 + $0x1c8] sm:$0xff]
  %v1584 = vld [vmem:[%s1 + $0x1d0] sm:$0xff]
  %v1585 = vld [vmem:[%s1 + $0x1d8] sm:$0xff]
  %v1586 = vld [vmem:[%s1 + $0x1e0] sm:$0xff]
  %v1587 = vld [vmem:[%s1 + $0x1e8] sm:$0xff]
  %v1588 = vld [vmem:[%s1 + $0x1f0] sm:$0xff]
  %v1589 = vld [vmem:[%s1 + $0x1f8] sm:$0xff]
  %v1590 = vld [vmem:[%s1 + $0x200] sm:$0xff]
  %v1591 = vld [vmem:[%s1 + $0x208] sm:$0xff]
  %v1592 = vld [vmem:[%s1 + $0x210] sm:$0xff]
  %v1593 = vld [vmem:[%s1 + $0x218] sm:$0xff]
  %v1594 = vld [vmem:[%s1 + $0x220] sm:$0xff]
  %v1595 = vld [vmem:[%s1 + $0x228] sm:$0xff]
  %v1596 = vld [vmem:[%s1 + $0x230] sm:$0xff]
  %v1597 = vld [vmem:[%s1 + $0x238] sm:$0xff]
  %v1598 = vld [vmem:[%s1 + $0x240] sm:$0xff]
  %v1599 = vld [vmem:[%s1 + $0x248] sm:$0xff]
  %v1600 = vld [vmem:[%s1 + $0x250] sm:$0xff]
  %v1601 = vld [vmem:[%s1 + $0x258] sm:$0xff]
  %v1602 = vld [vmem:[%s1 + $0x260] sm:$0xff]
  %v1603 = vld [vmem:[%s1 + $0x268] sm:$0xff]
  %v1604 = vld [vmem:[%s1 + $0x270] sm:$0xff]
  %v1605 = vld [vmem:[%s1 + $0x278] sm:$0xff]
  %v1606 = vld [vmem:[%s1 + $0x280] sm:$0x1]
  %v1607 = vld [vmem:[%s1 + $0x288] sm:$0x1]
  %v1608 = vld [vmem:[%s1 + $0x290] sm:$0x1]
  %v1609 = vld [vmem:[%s1 + $0x298] sm:$0x1]
  %v1610 = vld [vmem:[%s1 + $0x2a0] sm:$0xff]
  %v1611 = vld [vmem:[%s1 + $0x2a8] sm:$0xff]
  %v1612 = vld [vmem:[%s1 + $0x2b0] sm:$0xff]
  %v1613 = vld [vmem:[%s1 + $0x2b8] sm:$0xff]
  %v1614 = vld [vmem:[%s1 + $0x2c0] sm:$0xff]
  %v1615 = vld [vmem:[%s1 + $0x2c8] sm:$0xff]
  %v1616 = vld [vmem:[%s1 + $0x2d0] sm:$0xff]
  %v1617 = vld [vmem:[%s1 + $0x2d8] sm:$0xff]
  %v1618 = vld [vmem:[%s1 + $0x2e0] sm:$0xff]
  %v1619 = vld [vmem:[%s1 + $0x2e8] sm:$0xff]
  %v1620 = vld [vmem:[%s1 + $0x2f0] sm:$0xff]
  %v1621 = vld [vmem:[%s1 + $0x2f8] sm:$0xff]
  %v1622 = vld [vmem:[%s1 + $0x300] sm:$0xff]
  %v1623 = vld [vmem:[%s1 + $0x308] sm:$0xff]
  %v1624 = vld [vmem:[%s1 + $0x310] sm:$0xff]
  %v1625 = vld [vmem:[%s1 + $0x318] sm:$0xff]
  %v1626 = vld [vmem:[%s1 + $0x320] sm:$0xff]
  %v1627 = vld [vmem:[%s1 + $0x328] sm:$0xff]
  %v1628 = vld [vmem:[%s1 + $0x330] sm:$0xff]
  %v1629 = vld [vmem:[%s1 + $0x338] sm:$0xff]
  %v1630 = vld [vmem:[%s1 + $0x340] sm:$0xff]
  %v1631 = vld [vmem:[%s1 + $0x348] sm:$0xff]
  %v1632 = vld [vmem:[%s1 + $0x350] sm:$0xff]
  %v1633 = vld [vmem:[%s1 + $0x358] sm:$0xff]
  %v1634 = vld [vmem:[%s1 + $0x360] sm:$0x1]
  %v1635 = vld [vmem:[%s1 + $0x368] sm:$0x1]
  %v1636 = vld [vmem:[%s1 + $0x370] sm:$0x1]
  %v1637 = vld [vmem:[%s1 + $0x378] sm:$0x1]
  %v1638 = vld [vmem:[%s1 + $0x380] sm:$0xff]
  %v1639 = vld [vmem:[%s1 + $0x388] sm:$0xff]
  %v1640 = vld [vmem:[%s1 + $0x390] sm:$0xff]
  %v1641 = vld [vmem:[%s1 + $0x398] sm:$0xff]
  %v1642 = vld [vmem:[%s1 + $0x3a0] sm:$0xff]
  %v1643 = vld [vmem:[%s1 + $0x3a8] sm:$0xff]
  %v1644 = vld [vmem:[%s1 + $0x3b0] sm:$0xff]
  %v1645 = vld [vmem:[%s1 + $0x3b8] sm:$0xff]
  %v1646 = vld [vmem:[%s1 + $0x3c0] sm:$0xff]
  %v1647 = vld [vmem:[%s1 + $0x3c8] sm:$0xff]
  %v1648 = vld [vmem:[%s1 + $0x3d0] sm:$0xff]
  %v1649 = vld [vmem:[%s1 + $0x3d8] sm:$0xff]
  %v1650 = vld [vmem:[%s1 + $0x3e0] sm:$0xff]
  %v1651 = vld [vmem:[%s1 + $0x3e8] sm:$0xff]
  %v1652 = vld [vmem:[%s1 + $0x3f0] sm:$0xff]
  %v1653 = vld [vmem:[%s1 + $0x3f8] sm:$0xff]
  %v1654 = vld [vmem:[%s1 + $0x400] sm:$0xff]
  %v1655 = vld [vmem:[%s1 + $0x408] sm:$0xff]
  %v1656 = vld [vmem:[%s1 + $0x410] sm:$0xff]
  %v1657 = vld [vmem:[%s1 + $0x418] sm:$0xff]
  %v1658 = vld [vmem:[%s1 + $0x420] sm:$0xff]
  %v1659 = vld [vmem:[%s1 + $0x428] sm:$0xff]
  %v1660 = vld [vmem:[%s1 + $0x430] sm:$0xff]
  %v1661 = vld [vmem:[%s1 + $0x438] sm:$0xff]
  %v1662 = vld [vmem:[%s1 + $0x440] sm:$0x1]
  %v1663 = vld [vmem:[%s1 + $0x448] sm:$0x1]
  %v1664 = vld [vmem:[%s1 + $0x450] sm:$0x1]
  %v1665 = vld [vmem:[%s1 + $0x458] sm:$0x1]
  %v1666 = vld [vmem:[%s1 + $0x460] sm:$0xff]
  %v1667 = vld [vmem:[%s1 + $0x468] sm:$0xff]
  %v1668 = vld [vmem:[%s1 + $0x470] sm:$0xff]
  %v1669 = vld [vmem:[%s1 + $0x478] sm:$0xff]
  %v1670 = vld [vmem:[%s1 + $0x480] sm:$0xff]
  %v1671 = vld [vmem:[%s1 + $0x488] sm:$0xff]
  %v1672 = vld [vmem:[%s1 + $0x490] sm:$0xff]
  %v1673 = vld [vmem:[%s1 + $0x498] sm:$0xff]
  %v1674 = vld [vmem:[%s1 + $0x4a0] sm:$0xff]
  %v1675 = vld [vmem:[%s1 + $0x4a8] sm:$0xff]
  %v1676 = vld [vmem:[%s1 + $0x4b0] sm:$0xff]
  %v1677 = vld [vmem:[%s1 + $0x4b8] sm:$0xff]
  %v1678 = vld [vmem:[%s1 + $0x4c0] sm:$0xff]
  %v1679 = vld [vmem:[%s1 + $0x4c8] sm:$0xff]
  %v1680 = vld [vmem:[%s1 + $0x4d0] sm:$0xff]
  %v1681 = vld [vmem:[%s1 + $0x4d8] sm:$0xff]
  %v1682 = vld [vmem:[%s1 + $0x4e0] sm:$0xff]
  %v1683 = vld [vmem:[%s1 + $0x4e8] sm:$0xff]
  %v1684 = vld [vmem:[%s1 + $0x4f0] sm:$0xff]
  %v1685 = vld [vmem:[%s1 + $0x4f8] sm:$0xff]
  %v1686 = vld [vmem:[%s1 + $0x500] sm:$0xff]
  %v1687 = vld [vmem:[%s1 + $0x508] sm:$0xff]
  %v1688 = vld [vmem:[%s1 + $0x510] sm:$0xff]
  %v1689 = vld [vmem:[%s1 + $0x518] sm:$0xff]
  %v1690 = vld [vmem:[%s1 + $0x520] sm:$0x1]
  %v1691 = vld [vmem:[%s1 + $0x528] sm:$0x1]
  %v1692 = vld [vmem:[%s1 + $0x530] sm:$0x1]
  %v1693 = vld [vmem:[%s1 + $0x538] sm:$0x1]
  %v1694 = vld [vmem:[%s1 + $0x540] sm:$0xff]
  %v1695 = vld [vmem:[%s1 + $0x548] sm:$0xff]
  %v1696 = vld [vmem:[%s1 + $0x550] sm:$0xff]
  %v1697 = vld [vmem:[%s1 + $0x558] sm:$0xff]
  %v1698 = vld [vmem:[%s1 + $0x560] sm:$0xff]
  %v1699 = vld [vmem:[%s1 + $0x568] sm:$0xff]
  %v1700 = vld [vmem:[%s1 + $0x570] sm:$0xff]
  %v1701 = vld [vmem:[%s1 + $0x578] sm:$0xff]
  %v1702 = vld [vmem:[%s1 + $0x580] sm:$0xff]
  %v1703 = vld [vmem:[%s1 + $0x588] sm:$0xff]
  %v1704 = vld [vmem:[%s1 + $0x590] sm:$0xff]
  %v1705 = vld [vmem:[%s1 + $0x598] sm:$0xff]
  %v1706 = vld [vmem:[%s1 + $0x5a0] sm:$0xff]
  %v1707 = vld [vmem:[%s1 + $0x5a8] sm:$0xff]
  %v1708 = vld [vmem:[%s1 + $0x5b0] sm:$0xff]
  %v1709 = vld [vmem:[%s1 + $0x5b8] sm:$0xff]
  %v1710 = vld [vmem:[%s1 + $0x5c0] sm:$0xff]
  %v1711 = vld [vmem:[%s1 + $0x5c8] sm:$0xff]
  %v1712 = vld [vmem:[%s1 + $0x5d0] sm:$0xff]
  %v1713 = vld [vmem:[%s1 + $0x5d8] sm:$0xff]
  %v1714 = vld [vmem:[%s1 + $0x5e0] sm:$0xff]
  %v1715 = vld [vmem:[%s1 + $0x5e8] sm:$0xff]
  %v1716 = vld [vmem:[%s1 + $0x5f0] sm:$0xff]
  %v1717 = vld [vmem:[%s1 + $0x5f8] sm:$0xff]
  %v1718 = vld [vmem:[%s1 + $0x600] sm:$0x1]
  %v1719 = vld [vmem:[%s1 + $0x608] sm:$0x1]
  %v1720 = vld [vmem:[%s1 + $0x610] sm:$0x1]
  %v1721 = vld [vmem:[%s1 + $0x618] sm:$0x1]
  %v1722 = vld [vmem:[%s1 + $0x620] sm:$0xff]
  %v1723 = vld [vmem:[%s1 + $0x628] sm:$0xff]
  %v1724 = vld [vmem:[%s1 + $0x630] sm:$0xff]
  %v1725 = vld [vmem:[%s1 + $0x638] sm:$0xff]
  %v1726 = vld [vmem:[%s1 + $0x640] sm:$0xff]
  %v1727 = vld [vmem:[%s1 + $0x648] sm:$0xff]
  %v1728 = vld [vmem:[%s1 + $0x650] sm:$0xff]
  %v1729 = vld [vmem:[%s1 + $0x658] sm:$0xff]
  %v1730 = vld [vmem:[%s1 + $0x660] sm:$0xff]
  %v1731 = vld [vmem:[%s1 + $0x668] sm:$0xff]
  %v1732 = vld [vmem:[%s1 + $0x670] sm:$0xff]
  %v1733 = vld [vmem:[%s1 + $0x678] sm:$0xff]
  %v1734 = vld [vmem:[%s1 + $0x680] sm:$0xff]
  %v1735 = vld [vmem:[%s1 + $0x688] sm:$0xff]
  %v1736 = vld [vmem:[%s1 + $0x690] sm:$0xff]
  %v1737 = vld [vmem:[%s1 + $0x698] sm:$0xff]
  %v1738 = vld [vmem:[%s1 + $0x6a0] sm:$0xff]
  %v1739 = vld [vmem:[%s1 + $0x6a8] sm:$0xff]
  %v1740 = vld [vmem:[%s1 + $0x6b0] sm:$0xff]
  %v1741 = vld [vmem:[%s1 + $0x6b8] sm:$0xff]
  %v1742 = vld [vmem:[%s1 + $0x6c0] sm:$0xff]
  %v1743 = vld [vmem:[%s1 + $0x6c8] sm:$0xff]
  %v1744 = vld [vmem:[%s1 + $0x6d0] sm:$0xff]
  %v1745 = vld [vmem:[%s1 + $0x6d8] sm:$0xff]
  %v1746 = vld [vmem:[%s1 + $0x6e0] sm:$0x1]
  %v1747 = vld [vmem:[%s1 + $0x6e8] sm:$0x1]
  %v1748 = vld [vmem:[%s1 + $0x6f0] sm:$0x1]
  %v1749 = vld [vmem:[%s1 + $0x6f8] sm:$0x1]
  %v1750 = vadd.f32 %v1526, %v1530
  %v1751 = vadd.f32 %v1750, %v1534
  %v1752 = vadd.f32 %v1751, %v1538
  %v1753 = vadd.f32 %v1752, %v1542
  %v1754 = vadd.f32 %v1753, %v1546
  %vm1755 = vcmask 1040384
  %v1756 = vsel %vm1755, %v1550, 0.0
  %v1757 = vadd.f32 %v1754, %v1756
  %v1758 = vrot.slane %v1757, 4
  %v1759 = vadd.f32 %v1757, %v1758
  %v1760 = vrot.slane %v1759, 2
  %v1761 = vadd.f32 %v1759, %v1760
  %v1762 = vrot.slane %v1761, 1
  %v1763 = vadd.f32 %v1761, %v1762
  %v1764 = vadd.f32 %v1527, %v1531
  %v1765 = vadd.f32 %v1764, %v1535
  %v1766 = vadd.f32 %v1765, %v1539
  %v1767 = vadd.f32 %v1766, %v1543
  %v1768 = vadd.f32 %v1767, %v1547
  %v1769 = vsel %vm1755, %v1551, 0.0
  %v1770 = vadd.f32 %v1768, %v1769
  %v1771 = vrot.slane %v1770, 4
  %v1772 = vadd.f32 %v1770, %v1771
  %v1773 = vrot.slane %v1772, 2
  %v1774 = vadd.f32 %v1772, %v1773
  %v1775 = vrot.slane %v1774, 1
  %v1776 = vadd.f32 %v1774, %v1775
  %v1777 = vadd.f32 %v1528, %v1532
  %v1778 = vadd.f32 %v1777, %v1536
  %v1779 = vadd.f32 %v1778, %v1540
  %v1780 = vadd.f32 %v1779, %v1544
  %v1781 = vadd.f32 %v1780, %v1548
  %v1782 = vsel %vm1755, %v1552, 0.0
  %v1783 = vadd.f32 %v1781, %v1782
  %v1784 = vrot.slane %v1783, 4
  %v1785 = vadd.f32 %v1783, %v1784
  %v1786 = vrot.slane %v1785, 2
  %v1787 = vadd.f32 %v1785, %v1786
  %v1788 = vrot.slane %v1787, 1
  %v1789 = vadd.f32 %v1787, %v1788
  %v1790 = vadd.f32 %v1529, %v1533
  %v1791 = vadd.f32 %v1790, %v1537
  %v1792 = vadd.f32 %v1791, %v1541
  %v1793 = vadd.f32 %v1792, %v1545
  %v1794 = vadd.f32 %v1793, %v1549
  %v1795 = vsel %vm1755, %v1553, 0.0
  %v1796 = vadd.f32 %v1794, %v1795
  %v1797 = vrot.slane %v1796, 4
  %v1798 = vadd.f32 %v1796, %v1797
  %v1799 = vrot.slane %v1798, 2
  %v1800 = vadd.f32 %v1798, %v1799
  %v1801 = vrot.slane %v1800, 1
  %v1802 = vadd.f32 %v1800, %v1801
  %v1803 = vadd.f32 %v1554, %v1558
  %v1804 = vadd.f32 %v1803, %v1562
  %v1805 = vadd.f32 %v1804, %v1566
  %v1806 = vadd.f32 %v1805, %v1570
  %v1807 = vadd.f32 %v1806, %v1574
  %v1808 = vsel %vm1755, %v1578, 0.0
  %v1809 = vadd.f32 %v1807, %v1808
  %v1810 = vrot.slane %v1809, 4
  %v1811 = vadd.f32 %v1809, %v1810
  %v1812 = vrot.slane %v1811, 2
  %v1813 = vadd.f32 %v1811, %v1812
  %v1814 = vrot.slane %v1813, 1
  %v1815 = vadd.f32 %v1813, %v1814
  %v1816 = vadd.f32 %v1555, %v1559
  %v1817 = vadd.f32 %v1816, %v1563
  %v1818 = vadd.f32 %v1817, %v1567
  %v1819 = vadd.f32 %v1818, %v1571
  %v1820 = vadd.f32 %v1819, %v1575
  %v1821 = vsel %vm1755, %v1579, 0.0
  %v1822 = vadd.f32 %v1820, %v1821
  %v1823 = vrot.slane %v1822, 4
  %v1824 = vadd.f32 %v1822, %v1823
  %v1825 = vrot.slane %v1824, 2
  %v1826 = vadd.f32 %v1824, %v1825
  %v1827 = vrot.slane %v1826, 1
  %v1828 = vadd.f32 %v1826, %v1827
  %v1829 = vadd.f32 %v1556, %v1560
  %v1830 = vadd.f32 %v1829, %v1564
  %v1831 = vadd.f32 %v1830, %v1568
  %v1832 = vadd.f32 %v1831, %v1572
  %v1833 = vadd.f32 %v1832, %v1576
  %v1834 = vsel %vm1755, %v1580, 0.0
  %v1835 = vadd.f32 %v1833, %v1834
  %v1836 = vrot.slane %v1835, 4
  %v1837 = vadd.f32 %v1835, %v1836
  %v1838 = vrot.slane %v1837, 2
  %v1839 = vadd.f32 %v1837, %v1838
  %v1840 = vrot.slane %v1839, 1
  %v1841 = vadd.f32 %v1839, %v1840
  %v1842 = vadd.f32 %v1557, %v1561
  %v1843 = vadd.f32 %v1842, %v1565
  %v1844 = vadd.f32 %v1843, %v1569
  %v1845 = vadd.f32 %v1844, %v1573
  %v1846 = vadd.f32 %v1845, %v1577
  %v1847 = vsel %vm1755, %v1581, 0.0
  %v1848 = vadd.f32 %v1846, %v1847
  %v1849 = vrot.slane %v1848, 4
  %v1850 = vadd.f32 %v1848, %v1849
  %v1851 = vrot.slane %v1850, 2
  %v1852 = vadd.f32 %v1850, %v1851
  %v1853 = vrot.slane %v1852, 1
  %v1854 = vadd.f32 %v1852, %v1853
  %v1855 = vadd.f32 %v1582, %v1586
  %v1856 = vadd.f32 %v1855, %v1590
  %v1857 = vadd.f32 %v1856, %v1594
  %v1858 = vadd.f32 %v1857, %v1598
  %v1859 = vadd.f32 %v1858, %v1602
  %v1860 = vsel %vm1755, %v1606, 0.0
  %v1861 = vadd.f32 %v1859, %v1860
  %v1862 = vrot.slane %v1861, 4
  %v1863 = vadd.f32 %v1861, %v1862
  %v1864 = vrot.slane %v1863, 2
  %v1865 = vadd.f32 %v1863, %v1864
  %v1866 = vrot.slane %v1865, 1
  %v1867 = vadd.f32 %v1865, %v1866
  %v1868 = vadd.f32 %v1583, %v1587
  %v1869 = vadd.f32 %v1868, %v1591
  %v1870 = vadd.f32 %v1869, %v1595
  %v1871 = vadd.f32 %v1870, %v1599
  %v1872 = vadd.f32 %v1871, %v1603
  %v1873 = vsel %vm1755, %v1607, 0.0
  %v1874 = vadd.f32 %v1872, %v1873
  %v1875 = vrot.slane %v1874, 4
  %v1876 = vadd.f32 %v1874, %v1875
  %v1877 = vrot.slane %v1876, 2
  %v1878 = vadd.f32 %v1876, %v1877
  %v1879 = vrot.slane %v1878, 1
  %v1880 = vadd.f32 %v1878, %v1879
  %v1881 = vadd.f32 %v1584, %v1588
  %v1882 = vadd.f32 %v1881, %v1592
  %v1883 = vadd.f32 %v1882, %v1596
  %v1884 = vadd.f32 %v1883, %v1600
  %v1885 = vadd.f32 %v1884, %v1604
  %v1886 = vsel %vm1755, %v1608, 0.0
  %v1887 = vadd.f32 %v1885, %v1886
  %v1888 = vrot.slane %v1887, 4
  %v1889 = vadd.f32 %v1887, %v1888
  %v1890 = vrot.slane %v1889, 2
  %v1891 = vadd.f32 %v1889, %v1890
  %v1892 = vrot.slane %v1891, 1
  %v1893 = vadd.f32 %v1891, %v1892
  %v1894 = vadd.f32 %v1585, %v1589
  %v1895 = vadd.f32 %v1894, %v1593
  %v1896 = vadd.f32 %v1895, %v1597
  %v1897 = vadd.f32 %v1896, %v1601
  %v1898 = vadd.f32 %v1897, %v1605
  %v1899 = vsel %vm1755, %v1609, 0.0
  %v1900 = vadd.f32 %v1898, %v1899
  %v1901 = vrot.slane %v1900, 4
  %v1902 = vadd.f32 %v1900, %v1901
  %v1903 = vrot.slane %v1902, 2
  %v1904 = vadd.f32 %v1902, %v1903
  %v1905 = vrot.slane %v1904, 1
  %v1906 = vadd.f32 %v1904, %v1905
  %v1907 = vadd.f32 %v1610, %v1614
  %v1908 = vadd.f32 %v1907, %v1618
  %v1909 = vadd.f32 %v1908, %v1622
  %v1910 = vadd.f32 %v1909, %v1626
  %v1911 = vadd.f32 %v1910, %v1630
  %v1912 = vsel %vm1755, %v1634, 0.0
  %v1913 = vadd.f32 %v1911, %v1912
  %v1914 = vrot.slane %v1913, 4
  %v1915 = vadd.f32 %v1913, %v1914
  %v1916 = vrot.slane %v1915, 2
  %v1917 = vadd.f32 %v1915, %v1916
  %v1918 = vrot.slane %v1917, 1
  %v1919 = vadd.f32 %v1917, %v1918
  %v1920 = vadd.f32 %v1611, %v1615
  %v1921 = vadd.f32 %v1920, %v1619
  %v1922 = vadd.f32 %v1921, %v1623
  %v1923 = vadd.f32 %v1922, %v1627
  %v1924 = vadd.f32 %v1923, %v1631
  %v1925 = vsel %vm1755, %v1635, 0.0
  %v1926 = vadd.f32 %v1924, %v1925
  %v1927 = vrot.slane %v1926, 4
  %v1928 = vadd.f32 %v1926, %v1927
  %v1929 = vrot.slane %v1928, 2
  %v1930 = vadd.f32 %v1928, %v1929
  %v1931 = vrot.slane %v1930, 1
  %v1932 = vadd.f32 %v1930, %v1931
  %v1933 = vadd.f32 %v1612, %v1616
  %v1934 = vadd.f32 %v1933, %v1620
  %v1935 = vadd.f32 %v1934, %v1624
  %v1936 = vadd.f32 %v1935, %v1628
  %v1937 = vadd.f32 %v1936, %v1632
  %v1938 = vsel %vm1755, %v1636, 0.0
  %v1939 = vadd.f32 %v1937, %v1938
  %v1940 = vrot.slane %v1939, 4
  %v1941 = vadd.f32 %v1939, %v1940
  %v1942 = vrot.slane %v1941, 2
  %v1943 = vadd.f32 %v1941, %v1942
  %v1944 = vrot.slane %v1943, 1
  %v1945 = vadd.f32 %v1943, %v1944
  %v1946 = vadd.f32 %v1613, %v1617
  %v1947 = vadd.f32 %v1946, %v1621
  %v1948 = vadd.f32 %v1947, %v1625
  %v1949 = vadd.f32 %v1948, %v1629
  %v1950 = vadd.f32 %v1949, %v1633
  %v1951 = vsel %vm1755, %v1637, 0.0
  %v1952 = vadd.f32 %v1950, %v1951
  %v1953 = vrot.slane %v1952, 4
  %v1954 = vadd.f32 %v1952, %v1953
  %v1955 = vrot.slane %v1954, 2
  %v1956 = vadd.f32 %v1954, %v1955
  %v1957 = vrot.slane %v1956, 1
  %v1958 = vadd.f32 %v1956, %v1957
  %v1959 = vadd.f32 %v1638, %v1642
  %v1960 = vadd.f32 %v1959, %v1646
  %v1961 = vadd.f32 %v1960, %v1650
  %v1962 = vadd.f32 %v1961, %v1654
  %v1963 = vadd.f32 %v1962, %v1658
  %v1964 = vsel %vm1755, %v1662, 0.0
  %v1965 = vadd.f32 %v1963, %v1964
  %v1966 = vrot.slane %v1965, 4
  %v1967 = vadd.f32 %v1965, %v1966
  %v1968 = vrot.slane %v1967, 2
  %v1969 = vadd.f32 %v1967, %v1968
  %v1970 = vrot.slane %v1969, 1
  %v1971 = vadd.f32 %v1969, %v1970
  %v1972 = vadd.f32 %v1639, %v1643
  %v1973 = vadd.f32 %v1972, %v1647
  %v1974 = vadd.f32 %v1973, %v1651
  %v1975 = vadd.f32 %v1974, %v1655
  %v1976 = vadd.f32 %v1975, %v1659
  %v1977 = vsel %vm1755, %v1663, 0.0
  %v1978 = vadd.f32 %v1976, %v1977
  %v1979 = vrot.slane %v1978, 4
  %v1980 = vadd.f32 %v1978, %v1979
  %v1981 = vrot.slane %v1980, 2
  %v1982 = vadd.f32 %v1980, %v1981
  %v1983 = vrot.slane %v1982, 1
  %v1984 = vadd.f32 %v1982, %v1983
  %v1985 = vadd.f32 %v1640, %v1644
  %v1986 = vadd.f32 %v1985, %v1648
  %v1987 = vadd.f32 %v1986, %v1652
  %v1988 = vadd.f32 %v1987, %v1656
  %v1989 = vadd.f32 %v1988, %v1660
  %v1990 = vsel %vm1755, %v1664, 0.0
  %v1991 = vadd.f32 %v1989, %v1990
  %v1992 = vrot.slane %v1991, 4
  %v1993 = vadd.f32 %v1991, %v1992
  %v1994 = vrot.slane %v1993, 2
  %v1995 = vadd.f32 %v1993, %v1994
  %v1996 = vrot.slane %v1995, 1
  %v1997 = vadd.f32 %v1995, %v1996
  %v1998 = vadd.f32 %v1641, %v1645
  %v1999 = vadd.f32 %v1998, %v1649
  %v2000 = vadd.f32 %v1999, %v1653
  %v2001 = vadd.f32 %v2000, %v1657
  %v2002 = vadd.f32 %v2001, %v1661
  %v2003 = vsel %vm1755, %v1665, 0.0
  %v2004 = vadd.f32 %v2002, %v2003
  %v2005 = vrot.slane %v2004, 4
  %v2006 = vadd.f32 %v2004, %v2005
  %v2007 = vrot.slane %v2006, 2
  %v2008 = vadd.f32 %v2006, %v2007
  %v2009 = vrot.slane %v2008, 1
  %v2010 = vadd.f32 %v2008, %v2009
  %v2011 = vadd.f32 %v1666, %v1670
  %v2012 = vadd.f32 %v2011, %v1674
  %v2013 = vadd.f32 %v2012, %v1678
  %v2014 = vadd.f32 %v2013, %v1682
  %v2015 = vadd.f32 %v2014, %v1686
  %v2016 = vsel %vm1755, %v1690, 0.0
  %v2017 = vadd.f32 %v2015, %v2016
  %v2018 = vrot.slane %v2017, 4
  %v2019 = vadd.f32 %v2017, %v2018
  %v2020 = vrot.slane %v2019, 2
  %v2021 = vadd.f32 %v2019, %v2020
  %v2022 = vrot.slane %v2021, 1
  %v2023 = vadd.f32 %v2021, %v2022
  %v2024 = vadd.f32 %v1667, %v1671
  %v2025 = vadd.f32 %v2024, %v1675
  %v2026 = vadd.f32 %v2025, %v1679
  %v2027 = vadd.f32 %v2026, %v1683
  %v2028 = vadd.f32 %v2027, %v1687
  %v2029 = vsel %vm1755, %v1691, 0.0
  %v2030 = vadd.f32 %v2028, %v2029
  %v2031 = vrot.slane %v2030, 4
  %v2032 = vadd.f32 %v2030, %v2031
  %v2033 = vrot.slane %v2032, 2
  %v2034 = vadd.f32 %v2032, %v2033
  %v2035 = vrot.slane %v2034, 1
  %v2036 = vadd.f32 %v2034, %v2035
  %v2037 = vadd.f32 %v1668, %v1672
  %v2038 = vadd.f32 %v2037, %v1676
  %v2039 = vadd.f32 %v2038, %v1680
  %v2040 = vadd.f32 %v2039, %v1684
  %v2041 = vadd.f32 %v2040, %v1688
  %v2042 = vsel %vm1755, %v1692, 0.0
  %v2043 = vadd.f32 %v2041, %v2042
  %v2044 = vrot.slane %v2043, 4
  %v2045 = vadd.f32 %v2043, %v2044
  %v2046 = vrot.slane %v2045, 2
  %v2047 = vadd.f32 %v2045, %v2046
  %v2048 = vrot.slane %v2047, 1
  %v2049 = vadd.f32 %v2047, %v2048
  %v2050 = vadd.f32 %v1669, %v1673
  %v2051 = vadd.f32 %v2050, %v1677
  %v2052 = vadd.f32 %v2051, %v1681
  %v2053 = vadd.f32 %v2052, %v1685
  %v2054 = vadd.f32 %v2053, %v1689
  %v2055 = vsel %vm1755, %v1693, 0.0
  %v2056 = vadd.f32 %v2054, %v2055
  %v2057 = vrot.slane %v2056, 4
  %v2058 = vadd.f32 %v2056, %v2057
  %v2059 = vrot.slane %v2058, 2
  %v2060 = vadd.f32 %v2058, %v2059
  %v2061 = vrot.slane %v2060, 1
  %v2062 = vadd.f32 %v2060, %v2061
  %v2063 = vadd.f32 %v1694, %v1698
  %v2064 = vadd.f32 %v2063, %v1702
  %v2065 = vadd.f32 %v2064, %v1706
  %v2066 = vadd.f32 %v2065, %v1710
  %v2067 = vadd.f32 %v2066, %v1714
  %v2068 = vsel %vm1755, %v1718, 0.0
  %v2069 = vadd.f32 %v2067, %v2068
  %v2070 = vrot.slane %v2069, 4
  %v2071 = vadd.f32 %v2069, %v2070
  %v2072 = vrot.slane %v2071, 2
  %v2073 = vadd.f32 %v2071, %v2072
  %v2074 = vrot.slane %v2073, 1
  %v2075 = vadd.f32 %v2073, %v2074
  %v2076 = vadd.f32 %v1695, %v1699
  %v2077 = vadd.f32 %v2076, %v1703
  %v2078 = vadd.f32 %v2077, %v1707
  %v2079 = vadd.f32 %v2078, %v1711
  %v2080 = vadd.f32 %v2079, %v1715
  %v2081 = vsel %vm1755, %v1719, 0.0
  %v2082 = vadd.f32 %v2080, %v2081
  %v2083 = vrot.slane %v2082, 4
  %v2084 = vadd.f32 %v2082, %v2083
  %v2085 = vrot.slane %v2084, 2
  %v2086 = vadd.f32 %v2084, %v2085
  %v2087 = vrot.slane %v2086, 1
  %v2088 = vadd.f32 %v2086, %v2087
  %v2089 = vadd.f32 %v1696, %v1700
  %v2090 = vadd.f32 %v2089, %v1704
  %v2091 = vadd.f32 %v2090, %v1708
  %v2092 = vadd.f32 %v2091, %v1712
  %v2093 = vadd.f32 %v2092, %v1716
  %v2094 = vsel %vm1755, %v1720, 0.0
  %v2095 = vadd.f32 %v2093, %v2094
  %v2096 = vrot.slane %v2095, 4
  %v2097 = vadd.f32 %v2095, %v2096
  %v2098 = vrot.slane %v2097, 2
  %v2099 = vadd.f32 %v2097, %v2098
  %v2100 = vrot.slane %v2099, 1
  %v2101 = vadd.f32 %v2099, %v2100
  %v2102 = vadd.f32 %v1697, %v1701
  %v2103 = vadd.f32 %v2102, %v1705
  %v2104 = vadd.f32 %v2103, %v1709
  %v2105 = vadd.f32 %v2104, %v1713
  %v2106 = vadd.f32 %v2105, %v1717
  %v2107 = vsel %vm1755, %v1721, 0.0
  %v2108 = vadd.f32 %v2106, %v2107
  %v2109 = vrot.slane %v2108, 4
  %v2110 = vadd.f32 %v2108, %v2109
  %v2111 = vrot.slane %v2110, 2
  %v2112 = vadd.f32 %v2110, %v2111
  %v2113 = vrot.slane %v2112, 1
  %v2114 = vadd.f32 %v2112, %v2113
  %v2115 = vadd.f32 %v1722, %v1726
  %v2116 = vadd.f32 %v2115, %v1730
  %v2117 = vadd.f32 %v2116, %v1734
  %v2118 = vadd.f32 %v2117, %v1738
  %v2119 = vadd.f32 %v2118, %v1742
  %v2120 = vsel %vm1755, %v1746, 0.0
  %v2121 = vadd.f32 %v2119, %v2120
  %v2122 = vrot.slane %v2121, 4
  %v2123 = vadd.f32 %v2121, %v2122
  %v2124 = vrot.slane %v2123, 2
  %v2125 = vadd.f32 %v2123, %v2124
  %v2126 = vrot.slane %v2125, 1
  %v2127 = vadd.f32 %v2125, %v2126
  %v2128 = vadd.f32 %v1723, %v1727
  %v2129 = vadd.f32 %v2128, %v1731
  %v2130 = vadd.f32 %v2129, %v1735
  %v2131 = vadd.f32 %v2130, %v1739
  %v2132 = vadd.f32 %v2131, %v1743
  %v2133 = vsel %vm1755, %v1747, 0.0
  %v2134 = vadd.f32 %v2132, %v2133
  %v2135 = vrot.slane %v2134, 4
  %v2136 = vadd.f32 %v2134, %v2135
  %v2137 = vrot.slane %v2136, 2
  %v2138 = vadd.f32 %v2136, %v2137
  %v2139 = vrot.slane %v2138, 1
  %v2140 = vadd.f32 %v2138, %v2139
  %v2141 = vadd.f32 %v1724, %v1728
  %v2142 = vadd.f32 %v2141, %v1732
  %v2143 = vadd.f32 %v2142, %v1736
  %v2144 = vadd.f32 %v2143, %v1740
  %v2145 = vadd.f32 %v2144, %v1744
  %v2146 = vsel %vm1755, %v1748, 0.0
  %v2147 = vadd.f32 %v2145, %v2146
  %v2148 = vrot.slane %v2147, 4
  %v2149 = vadd.f32 %v2147, %v2148
  %v2150 = vrot.slane %v2149, 2
  %v2151 = vadd.f32 %v2149, %v2150
  %v2152 = vrot.slane %v2151, 1
  %v2153 = vadd.f32 %v2151, %v2152
  %v2154 = vadd.f32 %v1725, %v1729
  %v2155 = vadd.f32 %v2154, %v1733
  %v2156 = vadd.f32 %v2155, %v1737
  %v2157 = vadd.f32 %v2156, %v1741
  %v2158 = vadd.f32 %v2157, %v1745
  %v2159 = vsel %vm1755, %v1749, 0.0
  %v2160 = vadd.f32 %v2158, %v2159
  %v2161 = vrot.slane %v2160, 4
  %v2162 = vadd.f32 %v2160, %v2161
  %v2163 = vrot.slane %v2162, 2
  %v2164 = vadd.f32 %v2162, %v2163
  %v2165 = vrot.slane %v2164, 1
  %v2166 = vadd.f32 %v2164, %v2165
  %v2167 = vld [vmem:[%s5] sm:$0xff]
  %v2168 = vld [vmem:[%s5 + $0x8] sm:$0xff]
  %v2169 = vld [vmem:[%s5 + $0x10] sm:$0xff]
  %v2170 = vld [vmem:[%s5 + $0x18] sm:$0xff]
  %v2171 = vld [vmem:[%s5 + $0x20] sm:$0xff]
  %v2172 = vld [vmem:[%s5 + $0x28] sm:$0xff]
  %v2173 = vld [vmem:[%s5 + $0x30] sm:$0xff]
  %v2174 = vld [vmem:[%s5 + $0x38] sm:$0xff]
  %v2175 = vld [vmem:[%s5 + $0x40] sm:$0xff]
  %v2176 = vld [vmem:[%s5 + $0x48] sm:$0xff]
  %v2177 = vld [vmem:[%s5 + $0x50] sm:$0xff]
  %v2178 = vld [vmem:[%s5 + $0x58] sm:$0xff]
  %v2179 = vld [vmem:[%s5 + $0x60] sm:$0xff]
  %v2180 = vld [vmem:[%s5 + $0x68] sm:$0xff]
  %v2181 = vld [vmem:[%s5 + $0x70] sm:$0xff]
  %v2182 = vld [vmem:[%s5 + $0x78] sm:$0xff]
  %v2183 = vld [vmem:[%s5 + $0x80] sm:$0xff]
  %v2184 = vld [vmem:[%s5 + $0x88] sm:$0xff]
  %v2185 = vld [vmem:[%s5 + $0x90] sm:$0xff]
  %v2186 = vld [vmem:[%s5 + $0x98] sm:$0xff]
  %v2187 = vld [vmem:[%s5 + $0xa0] sm:$0xff]
  %v2188 = vld [vmem:[%s5 + $0xa8] sm:$0xff]
  %v2189 = vld [vmem:[%s5 + $0xb0] sm:$0xff]
  %v2190 = vld [vmem:[%s5 + $0xb8] sm:$0xff]
  %v2191 = vld [vmem:[%s5 + $0xc0] sm:$0xff]
  %v2192 = vld [vmem:[%s5 + $0xc8] sm:$0xff]
  %v2193 = vld [vmem:[%s5 + $0xd0] sm:$0xff]
  %v2194 = vld [vmem:[%s5 + $0xd8] sm:$0xff]
  %v2195 = vld [vmem:[%s5 + $0xe0] sm:$0xff]
  %v2196 = vld [vmem:[%s5 + $0xe8] sm:$0xff]
  %v2197 = vld [vmem:[%s5 + $0xf0] sm:$0xff]
  %v2198 = vld [vmem:[%s5 + $0xf8] sm:$0xff]
  %v2199 = vld [vmem:[%s5 + $0x100] sm:$0xff]
  %v2200 = vld [vmem:[%s5 + $0x108] sm:$0xff]
  %v2201 = vld [vmem:[%s5 + $0x110] sm:$0xff]
  %v2202 = vld [vmem:[%s5 + $0x118] sm:$0xff]
  %v2203 = vld [vmem:[%s5 + $0x120] sm:$0xff]
  %v2204 = vld [vmem:[%s5 + $0x128] sm:$0xff]
  %v2205 = vld [vmem:[%s5 + $0x130] sm:$0xff]
  %v2206 = vld [vmem:[%s5 + $0x138] sm:$0xff]
  %v2207 = vld [vmem:[%s5 + $0x140] sm:$0xff]
  %v2208 = vld [vmem:[%s5 + $0x148] sm:$0xff]
  %v2209 = vld [vmem:[%s5 + $0x150] sm:$0xff]
  %v2210 = vld [vmem:[%s5 + $0x158] sm:$0xff]
  %v2211 = vld [vmem:[%s5 + $0x160] sm:$0xff]
  %v2212 = vld [vmem:[%s5 + $0x168] sm:$0xff]
  %v2213 = vld [vmem:[%s5 + $0x170] sm:$0xff]
  %v2214 = vld [vmem:[%s5 + $0x178] sm:$0xff]
  %v2215 = vld [vmem:[%s5 + $0x180] sm:$0xff]
  %v2216 = vld [vmem:[%s5 + $0x188] sm:$0xff]
  %v2217 = vld [vmem:[%s5 + $0x190] sm:$0xff]
  %v2218 = vld [vmem:[%s5 + $0x198] sm:$0xff]
  %v2219 = vld [vmem:[%s5 + $0x1a0] sm:$0xff]
  %v2220 = vld [vmem:[%s5 + $0x1a8] sm:$0xff]
  %v2221 = vld [vmem:[%s5 + $0x1b0] sm:$0xff]
  %v2222 = vld [vmem:[%s5 + $0x1b8] sm:$0xff]
  %v2223 = vld [vmem:[%s5 + $0x1c0] sm:$0xff]
  %v2224 = vld [vmem:[%s5 + $0x1c8] sm:$0xff]
  %v2225 = vld [vmem:[%s5 + $0x1d0] sm:$0xff]
  %v2226 = vld [vmem:[%s5 + $0x1d8] sm:$0xff]
  %v2227 = vld [vmem:[%s5 + $0x1e0] sm:$0xff]
  %v2228 = vld [vmem:[%s5 + $0x1e8] sm:$0xff]
  %v2229 = vld [vmem:[%s5 + $0x1f0] sm:$0xff]
  %v2230 = vld [vmem:[%s5 + $0x1f8] sm:$0xff]
  %v2231 = vld [vmem:[%s6] sm:$0x1]
  %v2232 = vmul.f32 %v2231, 49.0
  %v2234 = vperm.slane %v2232, 0
  %vm2268 = vcmask 1041409
  %v2269 = vsel %vm2268, %v1815, %v1763
  %vm2270 = vcmask 1042434
  %v2271 = vsel %vm2270, %v1867, %v2269
  %vm2272 = vcmask 1043459
  %v2273 = vsel %vm2272, %v1919, %v2271
  %vm2274 = vcmask 1044484
  %v2275 = vsel %vm2274, %v1971, %v2273
  %vm2276 = vcmask 1045509
  %v2277 = vsel %vm2276, %v2023, %v2275
  %vm2278 = vcmask 1046534
  %v2279 = vsel %vm2278, %v2075, %v2277
  %vm2280 = vcmask 1047559
  %v2281 = vsel %vm2280, %v2127, %v2279
  %v2282 = vsel %vm2268, %v1828, %v1776
  %v2283 = vsel %vm2270, %v1880, %v2282
  %v2284 = vsel %vm2272, %v1932, %v2283
  %v2285 = vsel %vm2274, %v1984, %v2284
  %v2286 = vsel %vm2276, %v2036, %v2285
  %v2287 = vsel %vm2278, %v2088, %v2286
  %v2288 = vsel %vm2280, %v2140, %v2287
  %v2289 = vsel %vm2268, %v1841, %v1789
  %v2290 = vsel %vm2270, %v1893, %v2289
  %v2291 = vsel %vm2272, %v1945, %v2290
  %v2292 = vsel %vm2274, %v1997, %v2291
  %v2293 = vsel %vm2276, %v2049, %v2292
  %v2294 = vsel %vm2278, %v2101, %v2293
  %v2295 = vsel %vm2280, %v2153, %v2294
  %v2296 = vsel %vm2268, %v1854, %v1802
  %v2297 = vsel %vm2270, %v1906, %v2296
  %v2298 = vsel %vm2272, %v1958, %v2297
  %v2299 = vsel %vm2274, %v2010, %v2298
  %v2300 = vsel %vm2276, %v2062, %v2299
  %v2301 = vsel %vm2278, %v2114, %v2300
  %v2302 = vsel %vm2280, %v2166, %v2301
  %2307 = vmatpush.msra.mxu0 %v2182
  %2308 = vmatpush.msra.mxu0 %v2181
  %2309 = vmatpush.msra.mxu0 %v2180
  %2310 = vmatpush.msra.mxu0 %v2179
  %2311 = vmatpush.msra.mxu0 %v2178
  %2312 = vmatpush.msra.mxu0 %v2177
  %2313 = vmatpush.msra.mxu0 %v2176
  %2314 = vmatpush.msra.mxu0 %v2175
  %2315 = vmatpush.msra.mxu0 %v2174
  %2316 = vmatpush.msra.mxu0 %v2173
  %2317 = vmatpush.msra.mxu0 %v2172
  %2318 = vmatpush.msra.mxu0 %v2171
  %2319 = vmatpush.msra.mxu0 %v2170
  %2320 = vmatpush.msra.mxu0 %v2169
  %2321 = vmatpush.msra.mxu0 %v2168
  %2322 = vmatpush.msra.mxu0 %v2167
  %2323 = vmatmul.f32.gmra.mxu0 %v2281
  %v2324 = vpop.f32.mrf.mxu0
  %v2325 = vadd.f32 %v2234, %v2324
  %2326 = vdwg.mxu0
  %2327 = vmatpush.msra.mxu0 %v2198
  %2328 = vmatpush.msra.mxu0 %v2197
  %2329 = vmatpush.msra.mxu0 %v2196
  %2330 = vmatpush.msra.mxu0 %v2195
  %2331 = vmatpush.msra.mxu0 %v2194
  %2332 = vmatpush.msra.mxu0 %v2193
  %2333 = vmatpush.msra.mxu0 %v2192
  %2334 = vmatpush.msra.mxu0 %v2191
  %2335 = vmatpush.msra.mxu0 %v2190
  %2336 = vmatpush.msra.mxu0 %v2189
  %2337 = vmatpush.msra.mxu0 %v2188
  %2338 = vmatpush.msra.mxu0 %v2187
  %2339 = vmatpush.msra.mxu0 %v2186
  %2340 = vmatpush.msra.mxu0 %v2185
  %2341 = vmatpush.msra.mxu0 %v2184
  %2342 = vmatpush.msra.mxu0 %v2183
  %2343 = vmatmul.f32.gmra.mxu0 %v2288
  %v2344 = vpop.f32.mrf.mxu0
  %v2345 = vadd.f32 %v2325, %v2344
  %2346 = vdwg.mxu0
  %2347 = vmatpush.msra.mxu0 %v2214
  %2348 = vmatpush.msra.mxu0 %v2213
  %2349 = vmatpush.msra.mxu0 %v2212
  %2350 = vmatpush.msra.mxu0 %v2211
  %2351 = vmatpush.msra.mxu0 %v2210
  %2352 = vmatpush.msra.mxu0 %v2209
  %2353 = vmatpush.msra.mxu0 %v2208
  %2354 = vmatpush.msra.mxu0 %v2207
  %2355 = vmatpush.msra.mxu0 %v2206
  %2356 = vmatpush.msra.mxu0 %v2205
  %2357 = vmatpush.msra.mxu0 %v2204
  %2358 = vmatpush.msra.mxu0 %v2203
  %2359 = vmatpush.msra.mxu0 %v2202
  %2360 = vmatpush.msra.mxu0 %v2201
  %2361 = vmatpush.msra.mxu0 %v2200
  %2362 = vmatpush.msra.mxu0 %v2199
  %2363 = vmatmul.f32.gmra.mxu0 %v2295
  %v2364 = vpop.f32.mrf.mxu0
  %v2365 = vadd.f32 %v2345, %v2364
  %2366 = vdwg.mxu0
  %2367 = vmatpush.msra.mxu0 %v2230
  %2368 = vmatpush.msra.mxu0 %v2229
  %2369 = vmatpush.msra.mxu0 %v2228
  %2370 = vmatpush.msra.mxu0 %v2227
  %2371 = vmatpush.msra.mxu0 %v2226
  %2372 = vmatpush.msra.mxu0 %v2225
  %2373 = vmatpush.msra.mxu0 %v2224
  %2374 = vmatpush.msra.mxu0 %v2223
  %2375 = vmatpush.msra.mxu0 %v2222
  %2376 = vmatpush.msra.mxu0 %v2221
  %2377 = vmatpush.msra.mxu0 %v2220
  %2378 = vmatpush.msra.mxu0 %v2219
  %2379 = vmatpush.msra.mxu0 %v2218
  %2380 = vmatpush.msra.mxu0 %v2217
  %2381 = vmatpush.msra.mxu0 %v2216
  %2382 = vmatpush.msra.mxu0 %v2215
  %2383 = vmatmul.f32.gmra.mxu0 %v2302
  %v2384 = vpop.f32.mrf.mxu0
  %v2385 = vadd.f32 %v2365, %v2384
  %2386 = vdwg.mxu0
  %v2387 = vadd.f32 %v2385, %v1525
  %v2388 = vld [vmem:[%s7] sm:$0xff]
  %v2389 = vld [vmem:[%s7 + $0x8] sm:$0xff]
  %v2390 = vld [vmem:[%s7 + $0x10] sm:$0xff]
  %v2391 = vld [vmem:[%s7 + $0x18] sm:$0xff]
  %v2392 = vld [vmem:[%s7 + $0x20] sm:$0xff]
  %v2393 = vld [vmem:[%s7 + $0x28] sm:$0xff]
  %v2394 = vld [vmem:[%s7 + $0x30] sm:$0xff]
  %v2395 = vld [vmem:[%s7 + $0x38] sm:$0xff]
  %v2396 = vld [vmem:[%s7 + $0x40] sm:$0xff]
  %v2397 = vld [vmem:[%s7 + $0x48] sm:$0xff]
  %v2398 = vld [vmem:[%s7 + $0x50] sm:$0xff]
  %v2399 = vld [vmem:[%s7 + $0x58] sm:$0xff]
  %v2400 = vld [vmem:[%s7 + $0x60] sm:$0xff]
  %v2401 = vld [vmem:[%s7 + $0x68] sm:$0xff]
  %v2402 = vld [vmem:[%s7 + $0x70] sm:$0xff]
  %v2403 = vld [vmem:[%s7 + $0x78] sm:$0xff]
  %v2404 = vld [vmem:[%s8] sm:$0x1]
  %v2406 = vperm.slane %v2404, 0
  %2408 = vmatpush.msra.mxu0 %v2403
  %2409 = vmatpush.msra.mxu0 %v2402
  %2410 = vmatpush.msra.mxu0 %v2401
  %2411 = vmatpush.msra.mxu0 %v2400
  %2412 = vmatpush.msra.mxu0 %v2399
  %2413 = vmatpush.msra.mxu0 %v2398
  %2414 = vmatpush.msra.mxu0 %v2397
  %2415 = vmatpush.msra.mxu0 %v2396
  %2416 = vmatpush.msra.mxu0 %v2395
  %2417 = vmatpush.msra.mxu0 %v2394
  %2418 = vmatpush.msra.mxu0 %v2393
  %2419 = vmatpush.msra.mxu0 %v2392
  %2420 = vmatpush.msra.mxu0 %v2391
  %2421 = vmatpush.msra.mxu0 %v2390
  %2422 = vmatpush.msra.mxu0 %v2389
  %2423 = vmatpush.msra.mxu0 %v2388
  %2424 = vmatmul.f32.gmra.mxu0 %v2387
  %v2425 = vpop.f32.mrf.mxu0
  %v2426 = vadd.f32 %v2406, %v2425
  %2427 = vdwg.mxu0
  %vm2428 = vcmask 15360
  %2429 = vst.msk [vmem:[%s9] sm:$0xff] %vm2428, %v2426
  // Predicated region
  $region38: #{tpu_custom_call.1} parent=0 // pred_check
    _
  $region39: #{tpu_custom_call.1} parent=0 // pred_check_branch
    %2431 = sbr.rel (0) target = $region41
  $region40: #{tpu_custom_call.1} parent=0 // pred_region
    _
  $region41: #{tpu_custom_call.1} parent=0 // pred_fallthru
    _
  // Predicated region
  $region42: #{tpu_custom_call.1} parent=0 // pred_check
    _
  $region43: #{tpu_custom_call.1} parent=0 // pred_check_branch
    %2433 = sbr.rel (0) target = $region45
  $region44: #{tpu_custom_call.1} parent=0 // pred_region
    _
  $region45: #{tpu_custom_call.1} parent=0 // pred_fallthru
    _

</llo_original>
